<compile_context>
chip_gen: v7x
topology: tpu7x:2x2x1
jax: 0.10.0
libtpu: 0.0.40
codegen_flags: <defaults>
</compile_context>

<pallas_src>
import functools

import jax
import jax.numpy as jnp
from jax import lax
from jax.experimental import pallas as pl
from jax.experimental.pallas import tpu as pltpu

LANE = 128


def _round_up(x, m):
    return (x + m - 1) // m * m


# ----------------------------------------------------------------------------
# Kernel 1: fused feature-conv matmul  (im2col rows @ W + b, ReLU)
# ----------------------------------------------------------------------------
def _conv_matmul_kernel(a_ref, w_ref, b_ref, o_ref):
    acc = jnp.dot(a_ref[...], w_ref[...], preferred_element_type=jnp.float32)
    acc = acc + b_ref[...]
    o_ref[...] = jnp.maximum(acc, 0.0)


def conv_matmul_relu(rows, wmat, bias, tile_m=256):
    """ReLU(rows @ wmat + bias) with lane-dense padding.

    rows:(M,K) f32, wmat:(K,N) f32, bias:(N,) f32.  K and N are zero padded to
    multiples of 128 (aligned MXU operands, unmasked output stores); M is zero
    padded to a multiple of tile_m and tiled over a "parallel" grid.  Returns
    the (M_pad, N_pad) f32 result; caller slices the valid part.
    """
    M, K = rows.shape
    K2, N = wmat.shape
    assert K == K2
    Kp, Np = _round_up(K, LANE), _round_up(N, LANE)
    Mp = _round_up(max(M, tile_m), tile_m)
    a = jnp.zeros((Mp, Kp), jnp.float32).at[:M, :K].set(rows).astype(jnp.bfloat16)
    w = jnp.zeros((Kp, Np), jnp.float32).at[:K, :N].set(wmat).astype(jnp.bfloat16)
    b = jnp.zeros((1, Np), jnp.float32).at[0, :N].set(bias)
    return pl.pallas_call(
        _conv_matmul_kernel,
        out_shape=jax.ShapeDtypeStruct((Mp, Np), jnp.float32),
        grid=(Mp // tile_m,),
        in_specs=[
            pl.BlockSpec((tile_m, Kp), lambda i: (i, 0)),
            pl.BlockSpec((Kp, Np), lambda i: (0, 0)),
            pl.BlockSpec((1, Np), lambda i: (0, 0)),
        ],
        out_specs=pl.BlockSpec((tile_m, Np), lambda i: (i, 0)),
        compiler_params=pltpu.CompilerParams(
            dimension_semantics=("parallel",)),
    )(a, w, b)


# ----------------------------------------------------------------------------
# Kernel 2: fused depthwise-xcorr + 1x1 heads + 'thicker' loss partials
# ----------------------------------------------------------------------------
def _rpn_loss_kernel(weff_ref, xwin_ref, bias_ref, lab_ref, lreg_ref, wreg_ref,
                     out_ref, *, apad):
    # xcorr + both 1x1 heads as one MXU matmul (template folded into weights).
    pred = jnp.dot(weff_ref[0], xwin_ref[0],
                   preferred_element_type=jnp.float32) + bias_ref[...]

    # ---- weighted CE over log_softmax (cls_type='thicker') ----
    l0 = pred[0:apad, :]               # class-0 logits  (apad, P_pad)
    l1 = pred[apad:2 * apad, :]        # class-1 logits
    m = jnp.maximum(l0, l1)
    lse = m + jnp.log(jnp.exp(l0 - m) + jnp.exp(l1 - m))
    ls0 = l0 - lse
    ls1 = l1 - lse
    lab = lab_ref[0]                   # {-1,0,1}; padding marked -1 (ignore)
    pos = (lab == 1).astype(jnp.float32)
    neg = (lab == 0).astype(jnp.float32)
    sum_pos = jnp.sum(-ls1 * pos)
    sum_neg = jnp.sum(-ls0 * neg)
    n_pos = jnp.sum(pos)
    n_neg = jnp.sum(neg)

    # ---- weighted L1 reg partial (padded rows/positions carry weight 0) ----
    preg = pred[2 * apad:, :]          # (4*apad, P_pad), sublane-aligned slice
    sum_reg = jnp.sum(jnp.abs(preg - lreg_ref[0]) * wreg_ref[0])

    # lane-dense partials row: [sum_pos, sum_neg, n_pos, n_neg, sum_reg, 0...]
    idx = lax.broadcasted_iota(jnp.int32, out_ref.shape, 2)
    vec = jnp.where(idx == 0, sum_pos,
          jnp.where(idx == 1, sum_neg,
          jnp.where(idx == 2, n_pos,
          jnp.where(idx == 3, n_neg,
          jnp.where(idx == 4, sum_reg, 0.0)))))
    out_ref[...] = vec


def rpn_fused_loss(zk, xwin, w_cls, b_cls, w_reg, b_reg,
                   label_cls, label_reg, reg_weight, anchors, p_valid):
    """zk:(B,C,K) template kernels, xwin:(B,C*K,P_pad) search windows."""
    B, C, K = zk.shape
    A = anchors
    Apad = _round_up(A, 8)
    O = 6 * Apad                        # [cls0 | cls1 | reg x4], Apad rows each
    CK = C * K
    Ppad = xwin.shape[-1]
    P = p_valid

    def pad_rows(mat, n):
        return jnp.zeros((n, mat.shape[1]), mat.dtype).at[:mat.shape[0]].set(mat)

    def pad_vec(v, n):
        return jnp.zeros((n,), v.dtype).at[:v.shape[0]].set(v)

    wblocks = [pad_rows(w_cls[0:A], Apad), pad_rows(w_cls[A:2 * A], Apad)]
    bblocks = [pad_vec(b_cls[0:A], Apad), pad_vec(b_cls[A:2 * A], Apad)]
    for j in range(4):
        wblocks.append(pad_rows(w_reg[j * A:(j + 1) * A], Apad))
        bblocks.append(pad_vec(b_reg[j * A:(j + 1) * A], Apad))
    w_heads = jnp.concatenate(wblocks, axis=0)                  # (O, C)
    b_heads = jnp.concatenate(bblocks, axis=0)                  # (O,)
    bias = jnp.broadcast_to(b_heads[:, None], (O, Ppad)).astype(jnp.float32)

    # Fold the template feature into the fused head weights:
    #   weff[b, o, c*K + k] = w_heads[o, c] * zf[b, c, k]
    weff = jnp.einsum('oc,bck->bock', w_heads, zk).reshape(B, O, CK)
    weff = weff.astype(jnp.bfloat16)
    xwin = xwin.astype(jnp.bfloat16)

    lab = jnp.full((B, Apad, Ppad), -1, jnp.int32)
    lab = lab.at[:, :A, :P].set(label_cls.reshape(B, A, P).astype(jnp.int32))
    lreg = jnp.zeros((B, 4, Apad, Ppad), jnp.float32)
    lreg = lreg.at[:, :, :A, :P].set(
        label_reg.reshape(B, 4, A, P).astype(jnp.float32))
    lreg = lreg.reshape(B, 4 * Apad, Ppad)
    wreg = jnp.zeros((B, 4, Apad, Ppad), jnp.float32)
    rw = jnp.broadcast_to(reg_weight.reshape(B, 1, A, P).astype(jnp.float32),
                          (B, 4, A, P))
    wreg = wreg.at[:, :, :A, :P].set(rw).reshape(B, 4 * Apad, Ppad)

    partials = pl.pallas_call(
        functools.partial(_rpn_loss_kernel, apad=Apad),
        out_shape=jax.ShapeDtypeStruct((B, 1, Ppad), jnp.float32),
        grid=(B,),
        in_specs=[
            pl.BlockSpec((1, O, CK), lambda b: (b, 0, 0)),
            pl.BlockSpec((1, CK, Ppad), lambda b: (b, 0, 0)),
            pl.BlockSpec((O, Ppad), lambda b: (0, 0)),
            pl.BlockSpec((1, Apad, Ppad), lambda b: (b, 0, 0)),
            pl.BlockSpec((1, 4 * Apad, Ppad), lambda b: (b, 0, 0)),
            pl.BlockSpec((1, 4 * Apad, Ppad), lambda b: (b, 0, 0)),
        ],
        out_specs=pl.BlockSpec((1, 1, Ppad), lambda b: (b, 0, 0)),
        compiler_params=pltpu.CompilerParams(
            dimension_semantics=("parallel",)),
    )(weff, xwin, bias, lab, lreg, wreg)

    tot = jnp.sum(partials[:, 0, :8], axis=0)
    # TODO(synk): PyTorch's nonzero()+squeeze quirk (exactly one pos/neg sample
    # -> that loss term becomes 0) is not replicated; masked-mean is used.
    cls_loss = (0.5 * tot[0] / jnp.maximum(tot[2], 1.0)
                + 0.5 * tot[1] / jnp.maximum(tot[3], 1.0))
    reg_loss = tot[4] / B
    return cls_loss, reg_loss


# ----------------------------------------------------------------------------
# JAX glue (im2col / window extraction, module wiring)
# ----------------------------------------------------------------------------
def _im2col_rows(x, kh, kw):
    """x:(B,C,H,W) -> (B*Ho*Wo, C*kh*kw) rows of valid conv patches."""
    B, C, H, W = x.shape
    Ho, Wo = H - kh + 1, W - kw + 1
    cols = []
    for u in range(kh):
        for v in range(kw):
            cols.append(x[:, :, u:u + Ho, v:v + Wo])
    p = jnp.stack(cols, axis=2)                         # (B,C,kh*kw,Ho,Wo)
    p = p.transpose(0, 3, 4, 1, 2).reshape(B * Ho * Wo, C * kh * kw)
    return p, Ho, Wo


def siamrpn_forward(params, template, search, label_cls, label_reg, reg_weight):
    """SiamRPN_ training forward (cls_type='thicker') -> (cls_loss, reg_loss)."""
    w_feat, b_feat = params["w_feat"], params["b_feat"]
    Cf, Cin, kh, kw = w_feat.shape
    B = template.shape[0]

    # --- shared feature extractor: ONE fused matmul for template + search ---
    zrows, Hzf, Wzf = _im2col_rows(template, kh, kw)
    xrows, Hxf, Wxf = _im2col_rows(search, kh, kw)
    Kz, Kx = Hzf * Wzf, Hxf * Wxf
    rows = jnp.concatenate([zrows, xrows], axis=0)
    wmat = w_feat.reshape(Cf, Cin * kh * kw).T
    feat = conv_matmul_relu(rows, wmat, b_feat)          # (M_pad, 128) f32
    zf = feat[:B * Kz, :Cf].reshape(B, Kz, Cf)
    xf = feat[B * Kz:B * Kz + B * Kx, :Cf].reshape(B, Hxf, Wxf, Cf)

    # --- depthwise-xcorr operands: template kernel + search windows ---
    zk = zf.transpose(0, 2, 1)                           # (B, Cf, Kz)
    Ho, Wo = Hxf - Hzf + 1, Wxf - Wzf + 1
    P = Ho * Wo
    # TODO(synk): at production feature sizes this window expansion should move
    # in-kernel (DMA the compact xf block, slide with pl.ds) to avoid the
    # K-fold HBM blow-up; at these toy sizes it is negligible.
    wins = []
    for u in range(Hzf):
        for v in range(Wzf):
            wins.append(xf[:, u:u + Ho, v:v + Wo, :])
    xw = jnp.stack(wins, axis=1)                         # (B,Kz,Ho,Wo,Cf)
    xw = xw.transpose(0, 4, 1, 2, 3).reshape(B, Cf * Kz, P)
    Ppad = _round_up(P, LANE)
    xwin = jnp.zeros((B, Cf * Kz, Ppad), jnp.float32).at[:, :, :P].set(xw)

    A = params["w_cls"].shape[0] // 2
    return rpn_fused_loss(zk, xwin,
                          params["w_cls"], params["b_cls"],
                          params["w_reg"], params["b_reg"],
                          label_cls, label_reg, reg_weight, A, P)


# ----------------------------------------------------------------------------
# main
# ----------------------------------------------------------------------------
if __name__ == "__main__":
    B, Cin, Cf, A = 2, 4, 16, 5          # anchors_nums=5, cls_type='thicker'
    Hz = Wz = 8                          # template 8x8  -> zf 6x6
    Hx = Wx = 16                         # search  16x16 -> xf 14x14
    Ho = Wo = 9                          # correlation output 9x9

    key = jax.random.PRNGKey(0)
    ks = jax.random.split(key, 12)

    params = {
        "w_feat": 0.1 * jax.random.normal(ks[0], (Cf, Cin, 3, 3), jnp.float32),
        "b_feat": 0.01 * jax.random.normal(ks[1], (Cf,), jnp.float32),
        "w_cls": 0.1 * jax.random.normal(ks[2], (2 * A, Cf), jnp.float32),
        "b_cls": 0.01 * jax.random.normal(ks[3], (2 * A,), jnp.float32),
        "w_reg": 0.1 * jax.random.normal(ks[4], (4 * A, Cf), jnp.float32),
        "b_reg": 0.01 * jax.random.normal(ks[5], (4 * A,), jnp.float32),
    }

    template = jax.random.normal(ks[6], (B, Cin, Hz, Wz), jnp.float32)
    search = jax.random.normal(ks[7], (B, Cin, Hx, Wx), jnp.float32)
    label_cls = jax.random.randint(ks[8], (B, A, Ho, Wo), -1, 2, jnp.int32)
    label_reg = jax.random.normal(ks[9], (B, 4, A, Ho, Wo), jnp.float32)
    reg_weight = jax.random.uniform(ks[10], (B, A, Ho, Wo), jnp.float32)

    fwd = jax.jit(siamrpn_forward)
    cls_loss, reg_loss = fwd(params, template, search,
                             label_cls, label_reg, reg_weight)
    jax.block_until_ready((cls_loss, reg_loss))
    print("KERNEL_OK")
</pallas_src>

<mosaic_0001>
module attributes {stable_mosaic.version = 11 : i64} {
  func.func @_conv_matmul_kernel(%arg0: i32, %arg1: memref<256x128xbf16, #tpu.memory_space<vmem>>, %arg2: memref<128x128xbf16, #tpu.memory_space<vmem>>, %arg3: memref<1x128xf32, #tpu.memory_space<vmem>>, %arg4: memref<256x128xf32, #tpu.memory_space<vmem>>) attributes {dimension_semantics = [#tpu.dimension_semantics<parallel>], iteration_bounds = array<i64: 2>, scalar_prefetch = 0 : i64, scratch_operands = 0 : i64, tpu.core_type = #tpu.core_type<tc>, window_params = [{transform_indices = @transform_0, window_bounds = array<i64: 256, 128>}, {pipeline_mode = #tpu.pipeline_mode<synchronous>, transform_indices = @transform_1, window_bounds = array<i64: 128, 128>}, {pipeline_mode = #tpu.pipeline_mode<synchronous>, transform_indices = @transform_2, window_bounds = array<i64: 1, 128>}, {transform_indices = @transform_3, window_bounds = array<i64: 256, 128>}]} {
    %c0 = arith.constant 0 : index
    %c0_0 = arith.constant 0 : index
    %0 = vector.load %arg1[%c0, %c0_0] : memref<256x128xbf16, #tpu.memory_space<vmem>>, vector<256x128xbf16>
    %c0_1 = arith.constant 0 : index
    %c0_2 = arith.constant 0 : index
    %1 = vector.load %arg2[%c0_1, %c0_2] : memref<128x128xbf16, #tpu.memory_space<vmem>>, vector<128x128xbf16>
    %cst = arith.constant dense<0.000000e+00> : vector<256x128xf32>
    %2 = tpu.matmul %0, %1, %cst {dimension_numbers = #tpu.dot_dimension_numbers<[1], [0], [0], [1], [0, 0, 1, 1], [], []>} : vector<256x128xbf16>, vector<128x128xbf16>, vector<256x128xf32> -> vector<256x128xf32>
    %c0_3 = arith.constant 0 : index
    %c0_4 = arith.constant 0 : index
    %3 = vector.load %arg3[%c0_3, %c0_4] : memref<1x128xf32, #tpu.memory_space<vmem>>, vector<1x128xf32>
    %4 = vector.broadcast %3 : vector<1x128xf32> to vector<256x128xf32>
    %5 = arith.addf %2, %4 : vector<256x128xf32>
    %cst_5 = arith.constant 0.000000e+00 : f32
    %6 = vector.broadcast %cst_5 : f32 to vector<256x128xf32>
    %7 = arith.maximumf %5, %6 : vector<256x128xf32>
    %c0_6 = arith.constant 0 : index
    %c0_7 = arith.constant 0 : index
    %8 = vector.load %arg4[%c0_6, %c0_7] : memref<256x128xf32, #tpu.memory_space<vmem>>, vector<256x128xf32>
    tpu.vector_store %arg4[%c0_6, %c0_7], %7 {strides = array<i32>} : memref<256x128xf32, #tpu.memory_space<vmem>>, vector<256x128xf32>,
    return
  }
  func.func @transform_0(%arg0: i32) -> (i32, i32) {
    %c0_i32 = arith.constant 0 : i32
    %c0_i32_0 = arith.constant 0 : i32
    return %arg0, %c0_i32 : i32, i32
  }
  func.func @transform_1(%arg0: i32) -> (i32, i32) {
    %c0_i32 = arith.constant 0 : i32
    %c0_i32_0 = arith.constant 0 : i32
    %c0_i32_1 = arith.constant 0 : i32
    return %c0_i32, %c0_i32_0 : i32, i32
  }
  func.func @transform_2(%arg0: i32) -> (i32, i32) {
    %c0_i32 = arith.constant 0 : i32
    %c0_i32_0 = arith.constant 0 : i32
    %c0_i32_1 = arith.constant 0 : i32
    return %c0_i32, %c0_i32_0 : i32, i32
  }
  func.func @transform_3(%arg0: i32) -> (i32, i32) {
    %c0_i32 = arith.constant 0 : i32
    %c0_i32_0 = arith.constant 0 : i32
    return %arg0, %c0_i32 : i32, i32
  }
}

module attributes {stable_mosaic.version = 11 : i64} {
  func.func @_rpn_loss_kernel(%arg0: i32, %arg1: memref<1x48x576xbf16, #tpu.memory_space<vmem>>, %arg2: memref<1x576x128xbf16, #tpu.memory_space<vmem>>, %arg3: memref<48x128xf32, #tpu.memory_space<vmem>>, %arg4: memref<1x8x128xi32, #tpu.memory_space<vmem>>, %arg5: memref<1x32x128xf32, #tpu.memory_space<vmem>>, %arg6: memref<1x32x128xf32, #tpu.memory_space<vmem>>, %arg7: memref<1x1x128xf32, #tpu.memory_space<vmem>>) attributes {dimension_semantics = [#tpu.dimension_semantics<parallel>], iteration_bounds = array<i64: 2>, scalar_prefetch = 0 : i64, scratch_operands = 0 : i64, tpu.core_type = #tpu.core_type<tc>, window_params = [{transform_indices = @transform_0, window_bounds = array<i64: 1, 48, 576>}, {transform_indices = @transform_1, window_bounds = array<i64: 1, 576, 128>}, {pipeline_mode = #tpu.pipeline_mode<synchronous>, transform_indices = @transform_2, window_bounds = array<i64: 48, 128>}, {transform_indices = @transform_3, window_bounds = array<i64: 1, 8, 128>}, {transform_indices = @transform_4, window_bounds = array<i64: 1, 32, 128>}, {transform_indices = @transform_5, window_bounds = array<i64: 1, 32, 128>}, {transform_indices = @transform_6, window_bounds = array<i64: 1, 1, 128>}]} {
    %c0 = arith.constant 0 : index
    %c0_0 = arith.constant 0 : index
    %c0_1 = arith.constant 0 : index
    %0 = vector.load %arg1[%c0, %c0_0, %c0_1] : memref<1x48x576xbf16, #tpu.memory_space<vmem>>, vector<1x48x576xbf16>
    %1 = vector.shape_cast %0 : vector<1x48x576xbf16> to vector<48x576xbf16>
    %c0_2 = arith.constant 0 : index
    %c0_3 = arith.constant 0 : index
    %c0_4 = arith.constant 0 : index
    %2 = vector.load %arg2[%c0_2, %c0_3, %c0_4] : memref<1x576x128xbf16, #tpu.memory_space<vmem>>, vector<1x576x128xbf16>
    %3 = vector.shape_cast %2 : vector<1x576x128xbf16> to vector<576x128xbf16>
    %cst = arith.constant dense<0.000000e+00> : vector<48x128xf32>
    %4 = tpu.matmul %1, %3, %cst {dimension_numbers = #tpu.dot_dimension_numbers<[1], [0], [0], [1], [0, 0, 1, 1], [], []>} : vector<48x576xbf16>, vector<576x128xbf16>, vector<48x128xf32> -> vector<48x128xf32>
    %c0_5 = arith.constant 0 : index
    %c0_6 = arith.constant 0 : index
    %5 = vector.load %arg3[%c0_5, %c0_6] : memref<48x128xf32, #tpu.memory_space<vmem>>, vector<48x128xf32>
    %6 = arith.addf %4, %5 : vector<48x128xf32>
    %7 = vector.extract_strided_slice %6 {offsets = [0, 0], sizes = [8, 128], strides = [1, 1]} : vector<48x128xf32> to vector<8x128xf32>
    %8 = vector.extract_strided_slice %6 {offsets = [8, 0], sizes = [8, 128], strides = [1, 1]} : vector<48x128xf32> to vector<8x128xf32>
    %9 = arith.maximumf %7, %8 : vector<8x128xf32>
    %10 = arith.subf %7, %9 : vector<8x128xf32>
    %11 = math.exp %10 : vector<8x128xf32>
    %12 = arith.subf %8, %9 : vector<8x128xf32>
    %13 = math.exp %12 : vector<8x128xf32>
    %14 = arith.addf %11, %13 : vector<8x128xf32>
    %15 = math.log %14 : vector<8x128xf32>
    %16 = arith.addf %9, %15 : vector<8x128xf32>
    %17 = arith.subf %7, %16 : vector<8x128xf32>
    %18 = arith.subf %8, %16 : vector<8x128xf32>
    %c0_7 = arith.constant 0 : index
    %c0_8 = arith.constant 0 : index
    %c0_9 = arith.constant 0 : index
    %19 = vector.load %arg4[%c0_7, %c0_8, %c0_9] : memref<1x8x128xi32, #tpu.memory_space<vmem>>, vector<1x8x128xi32>
    %20 = vector.shape_cast %19 : vector<1x8x128xi32> to vector<8x128xi32>
    %c1_i32 = arith.constant 1 : i32
    %21 = vector.broadcast %c1_i32 : i32 to vector<8x128xi32>
    %22 = arith.cmpi eq, %20, %21 : vector<8x128xi32>
    %23 = arith.extui %22 : vector<8x128xi1> to vector<8x128xi32>
    %24 = arith.sitofp %23 : vector<8x128xi32> to vector<8x128xf32>
    %c0_i32 = arith.constant 0 : i32
    %25 = vector.broadcast %c0_i32 : i32 to vector<8x128xi32>
    %26 = arith.cmpi eq, %20, %25 : vector<8x128xi32>
    %27 = arith.extui %26 : vector<8x128xi1> to vector<8x128xi32>
    %28 = arith.sitofp %27 : vector<8x128xi32> to vector<8x128xf32>
    %cst_10 = arith.constant 0.000000e+00 : f32
    %29 = vector.broadcast %cst_10 : f32 to vector<8x128xf32>
    %30 = arith.subf %29, %18 : vector<8x128xf32>
    %31 = arith.mulf %30, %24 : vector<8x128xf32>
    %32 = vector.shape_cast %31 : vector<8x128xf32> to vector<1x8x128xf32>
    %cst_11 = arith.constant dense<0.000000e+00> : vector<1xf32>
    %33 = vector.multi_reduction <add>, %32, %cst_11 [1, 2] : vector<1x8x128xf32> to vector<1xf32>
    %34 = vector.shape_cast %33 : vector<1xf32> to vector<1x1x1xf32>
    %35 = vector.extract %34[0, 0, 0] : f32 from vector<1x1x1xf32>
    %cst_12 = arith.constant 0.000000e+00 : f32
    %36 = vector.broadcast %cst_12 : f32 to vector<8x128xf32>
    %37 = arith.subf %36, %17 : vector<8x128xf32>
    %38 = arith.mulf %37, %28 : vector<8x128xf32>
    %39 = vector.shape_cast %38 : vector<8x128xf32> to vector<1x8x128xf32>
    %cst_13 = arith.constant dense<0.000000e+00> : vector<1xf32>
    %40 = vector.multi_reduction <add>, %39, %cst_13 [1, 2] : vector<1x8x128xf32> to vector<1xf32>
    %41 = vector.shape_cast %40 : vector<1xf32> to vector<1x1x1xf32>
    %42 = vector.extract %41[0, 0, 0] : f32 from vector<1x1x1xf32>
    %43 = vector.shape_cast %24 : vector<8x128xf32> to vector<1x8x128xf32>
    %cst_14 = arith.constant dense<0.000000e+00> : vector<1xf32>
    %44 = vector.multi_reduction <add>, %43, %cst_14 [1, 2] : vector<1x8x128xf32> to vector<1xf32>
    %45 = vector.shape_cast %44 : vector<1xf32> to vector<1x1x1xf32>
    %46 = vector.extract %45[0, 0, 0] : f32 from vector<1x1x1xf32>
    %47 = vector.shape_cast %28 : vector<8x128xf32> to vector<1x8x128xf32>
    %cst_15 = arith.constant dense<0.000000e+00> : vector<1xf32>
    %48 = vector.multi_reduction <add>, %47, %cst_15 [1, 2] : vector<1x8x128xf32> to vector<1xf32>
    %49 = vector.shape_cast %48 : vector<1xf32> to vector<1x1x1xf32>
    %50 = vector.extract %49[0, 0, 0] : f32 from vector<1x1x1xf32>
    %51 = vector.extract_strided_slice %6 {offsets = [16, 0], sizes = [32, 128], strides = [1, 1]} : vector<48x128xf32> to vector<32x128xf32>
    %c0_16 = arith.constant 0 : index
    %c0_17 = arith.constant 0 : index
    %c0_18 = arith.constant 0 : index
    %52 = vector.load %arg5[%c0_16, %c0_17, %c0_18] : memref<1x32x128xf32, #tpu.memory_space<vmem>>, vector<1x32x128xf32>
    %53 = vector.shape_cast %52 : vector<1x32x128xf32> to vector<32x128xf32>
    %54 = arith.subf %51, %53 : vector<32x128xf32>
    %55 = math.absf %54 : vector<32x128xf32>
    %c0_19 = arith.constant 0 : index
    %c0_20 = arith.constant 0 : index
    %c0_21 = arith.constant 0 : index
    %56 = vector.load %arg6[%c0_19, %c0_20, %c0_21] : memref<1x32x128xf32, #tpu.memory_space<vmem>>, vector<1x32x128xf32>
    %57 = vector.shape_cast %56 : vector<1x32x128xf32> to vector<32x128xf32>
    %58 = arith.mulf %55, %57 : vector<32x128xf32>
    %59 = vector.shape_cast %58 : vector<32x128xf32> to vector<1x32x128xf32>
    %cst_22 = arith.constant dense<0.000000e+00> : vector<1xf32>
    %60 = vector.multi_reduction <add>, %59, %cst_22 [1, 2] : vector<1x32x128xf32> to vector<1xf32>
    %61 = vector.shape_cast %60 : vector<1xf32> to vector<1x1x1xf32>
    %62 = vector.extract %61[0, 0, 0] : f32 from vector<1x1x1xf32>
    %63 = tpu.iota {dimensions = array<i32: 2>} : vector<1x1x128xi32>
    %c0_i32_23 = arith.constant 0 : i32
    %64 = vector.broadcast %c0_i32_23 : i32 to vector<1x1x128xi32>
    %65 = arith.cmpi eq, %63, %64 : vector<1x1x128xi32>
    %c1_i32_24 = arith.constant 1 : i32
    %66 = vector.broadcast %c1_i32_24 : i32 to vector<1x1x128xi32>
    %67 = arith.cmpi eq, %63, %66 : vector<1x1x128xi32>
    %c2_i32 = arith.constant 2 : i32
    %68 = vector.broadcast %c2_i32 : i32 to vector<1x1x128xi32>
    %69 = arith.cmpi eq, %63, %68 : vector<1x1x128xi32>
    %c3_i32 = arith.constant 3 : i32
    %70 = vector.broadcast %c3_i32 : i32 to vector<1x1x128xi32>
    %71 = arith.cmpi eq, %63, %70 : vector<1x1x128xi32>
    %c4_i32 = arith.constant 4 : i32
    %72 = vector.broadcast %c4_i32 : i32 to vector<1x1x128xi32>
    %73 = arith.cmpi eq, %63, %72 : vector<1x1x128xi32>
    %cst_25 = arith.constant 0.000000e+00 : f32
    %74 = vector.broadcast %62 : f32 to vector<1x1x128xf32>
    %75 = vector.broadcast %cst_25 : f32 to vector<1x1x128xf32>
    %76 = arith.select %73, %74, %75 : vector<1x1x128xi1>, vector<1x1x128xf32>
    %77 = vector.broadcast %50 : f32 to vector<1x1x128xf32>
    %78 = arith.select %71, %77, %76 : vector<1x1x128xi1>, vector<1x1x128xf32>
    %79 = vector.broadcast %46 : f32 to vector<1x1x128xf32>
    %80 = arith.select %69, %79, %78 : vector<1x1x128xi1>, vector<1x1x128xf32>
    %81 = vector.broadcast %42 : f32 to vector<1x1x128xf32>
    %82 = arith.select %67, %81, %80 : vector<1x1x128xi1>, vector<1x1x128xf32>
    %83 = vector.broadcast %35 : f32 to vector<1x1x128xf32>
    %84 = arith.select %65, %83, %82 : vector<1x1x128xi1>, vector<1x1x128xf32>
    %c0_26 = arith.constant 0 : index
    %c0_27 = arith.constant 0 : index
    %c0_28 = arith.constant 0 : index
    %85 = vector.load %arg7[%c0_26, %c0_27, %c0_28] : memref<1x1x128xf32, #tpu.memory_space<vmem>>, vector<1x1x128xf32>
    tpu.vector_store %arg7[%c0_26, %c0_27, %c0_28], %84 {strides = array<i32>} : memref<1x1x128xf32, #tpu.memory_space<vmem>>, vector<1x1x128xf32>,
    return
  }
  func.func @transform_0(%arg0: i32) -> (i32, i32, i32) {
    %c0_i32 = arith.constant 0 : i32
    %c0_i32_0 = arith.constant 0 : i32
    %c0_i32_1 = arith.constant 0 : i32
    return %arg0, %c0_i32, %c0_i32_0 : i32, i32, i32
  }
  func.func @transform_1(%arg0: i32) -> (i32, i32, i32) {
    %c0_i32 = arith.constant 0 : i32
    %c0_i32_0 = arith.constant 0 : i32
    %c0_i32_1 = arith.constant 0 : i32
    return %arg0, %c0_i32, %c0_i32_0 : i32, i32, i32
  }
  func.func @transform_2(%arg0: i32) -> (i32, i32) {
    %c0_i32 = arith.constant 0 : i32
    %c0_i32_0 = arith.constant 0 : i32
    %c0_i32_1 = arith.constant 0 : i32
    return %c0_i32, %c0_i32_0 : i32, i32
  }
  func.func @transform_3(%arg0: i32) -> (i32, i32, i32) {
    %c0_i32 = arith.constant 0 : i32
    %c0_i32_0 = arith.constant 0 : i32
    %c0_i32_1 = arith.constant 0 : i32
    return %arg0, %c0_i32, %c0_i32_0 : i32, i32, i32
  }
  func.func @transform_4(%arg0: i32) -> (i32, i32, i32) {
    %c0_i32 = arith.constant 0 : i32
    %c0_i32_0 = arith.constant 0 : i32
    %c0_i32_1 = arith.constant 0 : i32
    return %arg0, %c0_i32, %c0_i32_0 : i32, i32, i32
  }
  func.func @transform_5(%arg0: i32) -> (i32, i32, i32) {
    %c0_i32 = arith.constant 0 : i32
    %c0_i32_0 = arith.constant 0 : i32
    %c0_i32_1 = arith.constant 0 : i32
    return %arg0, %c0_i32, %c0_i32_0 : i32, i32, i32
  }
  func.func @transform_6(%arg0: i32) -> (i32, i32, i32) {
    %c0_i32 = arith.constant 0 : i32
    %c0_i32_0 = arith.constant 0 : i32
    %c0_i32_1 = arith.constant 0 : i32
    return %arg0, %c0_i32, %c0_i32_0 : i32, i32, i32
  }
}

</mosaic_0001>

<llo_original>
// kernel: siamrpn_forward.2
$region0: #{siamrpn_forward.2}
  #allocation0 [shape = 'u32[]', space=smem, size = 0x4, offset = 0x4, fixed_abs, tag = 'smem constant byte address 0x4 - core index']
  #allocation1 [shape = 'u32[144,128]{1,0:T(1,128)}', space=vmem, size = 0x12000, scoped, tag = 'internal scratch']
  %s0 = inlined_call_operand.vmem [shape: bf16[512,128], index: 0, kind: input, shape index: {}]
  %s1 = inlined_call_operand.vmem [shape: bf16[128,128], index: 1, kind: input, shape index: {}]
  %s2 = inlined_call_operand.vmem [shape: f32[1,128], index: 2, kind: input, shape index: {}]
  %s3 = inlined_call_operand.vmem [shape: f32[512,128], index: 3, kind: output, shape index: {}]
  %s4 = sld [smem:[#allocation0]]
  $region45: #{siamrpn_forward.2} parent=0
    _
  %s6 = ssub.s32 1, %s4
  %s7 = scalar_select 0, %s6, %s4
  loop: start=0, step=1, limit=4
  $region2: #{siamrpn_forward.2} parent=0 // loop_pre_header
    _
  $region3: #{siamrpn_forward.2} parent=0 // loop_header
    %s9 = sphi 0, %s13
    %p10 = scmp.ge.s32.totalorder %s9, 4
    %s19 = sphi 0, %s21
    %s22 = sphi 0, %s19
    %s23 = sphi 0, %s22
    %s39 = sphi 0, %s23
    %s43 = sphi 0, %s43
    %s45 = sphi 0, %s43
    %s46 = sphi 0, %s45
    %s60 = sphi 0, %s46
    %s64 = sphi 0, %s64
    %s66 = sphi 0, %s64
    %s67 = sphi 0, %s66
    %s81 = sphi 0, %s67
    %s87 = sphi 0, %s89
    %s90 = sphi 0, %s87
    %s91 = sphi 0, %s90
    %s107 = sphi 0, %s91
  $region4: #{siamrpn_forward.2} parent=0 // loop_header_branch
    %12 = sbr.rel (%p10) target = $region8
  $region5: #{siamrpn_forward.2} parent=0 // loop_body
    %s14 = ssub.s32 %s9, 1
    %s15 = ssub.s32 %s9, 2
    %s16 = sadd.s32 %s9, 1
    %s17 = ssub.s32 %s9, %s16
    %p18 = scmp.eq.s32.totalorder %s17, 0
    %s20 = sadd.s32 %s19, 1
    %s21 = scalar_select %p18, %s19, %s20
    %p24 = pneg %p18
    %p25 = scmp.eq.s32.totalorder %s9, 1
    %p26 = por %p24, %p25
    %p27 = scmp.ne.s32.totalorder %s19, %s22
    %p28 = scmp.eq.s32.totalorder %s9, 0
    %p29 = por %p27, %p28
    %p30 = scmp.ne.s32.totalorder %s19, %s22
    %p31 = scmp.eq.s32.totalorder %s14, 1
    %p32 = por %p30, %p31
    %p33 = scmp.ne.s32.totalorder %s22, %s23
    %p34 = scmp.eq.s32.totalorder %s14, 0
    %p35 = por %p33, %p34
    %p36 = scmp.ne.s32.totalorder %s22, %s23
    %p37 = scmp.eq.s32.totalorder %s15, 1
    %p38 = por %p36, %p37
    %p40 = scmp.ne.s32.totalorder %s23, %s39
    %p41 = scmp.eq.s32.totalorder %s15, 0
    %p42 = por %p40, %p41
    %s44 = sadd.s32 %s43, 1
    %p47 = scmp.eq.s32.totalorder %s9, 1
    %p48 = scmp.ne.s32.totalorder %s43, %s45
    %p49 = scmp.eq.s32.totalorder %s9, 0
    %p50 = por %p48, %p49
    %p51 = scmp.ne.s32.totalorder %s43, %s45
    %p52 = scmp.eq.s32.totalorder %s14, 1
    %p53 = por %p51, %p52
    %p54 = scmp.ne.s32.totalorder %s45, %s46
    %p55 = scmp.eq.s32.totalorder %s14, 0
    %p56 = por %p54, %p55
    %p57 = scmp.ne.s32.totalorder %s45, %s46
    %p58 = scmp.eq.s32.totalorder %s15, 1
    %p59 = por %p57, %p58
    %p61 = scmp.ne.s32.totalorder %s46, %s60
    %p62 = scmp.eq.s32.totalorder %s15, 0
    %p63 = por %p61, %p62
    %s65 = sadd.s32 %s64, 1
    %p68 = scmp.eq.s32.totalorder %s9, 1
    %p69 = scmp.ne.s32.totalorder %s64, %s66
    %p70 = scmp.eq.s32.totalorder %s9, 0
    %p71 = por %p69, %p70
    %p72 = scmp.ne.s32.totalorder %s64, %s66
    %p73 = scmp.eq.s32.totalorder %s14, 1
    %p74 = por %p72, %p73
    %p75 = scmp.ne.s32.totalorder %s66, %s67
    %p76 = scmp.eq.s32.totalorder %s14, 0
    %p77 = por %p75, %p76
    %p78 = scmp.ne.s32.totalorder %s66, %s67
    %p79 = scmp.eq.s32.totalorder %s15, 1
    %p80 = por %p78, %p79
    %p82 = scmp.ne.s32.totalorder %s67, %s81
    %p83 = scmp.eq.s32.totalorder %s15, 0
    %p84 = por %p82, %p83
    %s85 = ssub.s32 %s9, %s16
    %p86 = scmp.eq.s32.totalorder %s85, 0
    %s88 = sadd.s32 %s87, 1
    %s89 = scalar_select %p86, %s87, %s88
    %p92 = pneg %p86
    %p93 = scmp.eq.s32.totalorder %s9, 1
    %p94 = por %p92, %p93
    %p95 = scmp.ne.s32.totalorder %s87, %s90
    %p96 = scmp.eq.s32.totalorder %s9, 0
    %p97 = por %p95, %p96
    %p98 = scmp.ne.s32.totalorder %s87, %s90
    %p99 = scmp.eq.s32.totalorder %s14, 1
    %p100 = por %p98, %p99
    %p101 = scmp.ne.s32.totalorder %s90, %s91
    %p102 = scmp.eq.s32.totalorder %s14, 0
    %p103 = por %p101, %p102
    %p104 = scmp.ne.s32.totalorder %s90, %s91
    %p105 = scmp.eq.s32.totalorder %s15, 1
    %p106 = por %p104, %p105
    %p108 = scmp.ne.s32.totalorder %s91, %s107
    %p109 = scmp.eq.s32.totalorder %s15, 0
    %p110 = por %p108, %p109
    %p111 = scmp.le.s32.totalorder 1, %s9
    %p112 = scmp.lt.s32.totalorder %s9, 3
    %p113 = pnand %p111, %p112
    %p114 = pneg %p113
    // Predicated region
    $region9: #{siamrpn_forward.2} parent=5 // pred_check
      _
    $region10: #{siamrpn_forward.2} parent=5 // pred_check_branch
      %116 = sbr.rel (%p113) target = $region12
    $region11: #{siamrpn_forward.2} parent=5 // pred_region
      %s117 = ssub.s32 %s9, 1
      // Predicated region
      $region13: #{siamrpn_forward.2} parent=11 // pred_check
        %p118 = pneg %p56
      $region14: #{siamrpn_forward.2} parent=11 // pred_check_branch
        %120 = sbr.rel (%p118) target = $region16
      $region15: #{siamrpn_forward.2} parent=11 // pred_region
        _
      $region16: #{siamrpn_forward.2} parent=11 // pred_fallthru
        _
      // Predicated region
      $region17: #{siamrpn_forward.2} parent=11 // pred_check
        %p121 = pneg %p77
      $region18: #{siamrpn_forward.2} parent=11 // pred_check_branch
        %123 = sbr.rel (%p121) target = $region20
      $region19: #{siamrpn_forward.2} parent=11 // pred_region
        _
      $region20: #{siamrpn_forward.2} parent=11 // pred_fallthru
        _
    $region12: #{siamrpn_forward.2} parent=5 // pred_fallthru
      _
    %p124 = scmp.lt.s32.totalorder %s9, 2
    // Predicated region
    $region21: #{siamrpn_forward.2} parent=5 // pred_check
      %p125 = pneg %p124
    $region22: #{siamrpn_forward.2} parent=5 // pred_check_branch
      %127 = sbr.rel (%p125) target = $region24
    $region23: #{siamrpn_forward.2} parent=5 // pred_region
      // Predicated region
      $region25: #{siamrpn_forward.2} parent=23 // pred_check
        %p128 = pneg %p29
      $region26: #{siamrpn_forward.2} parent=23 // pred_check_branch
        %130 = sbr.rel (%p128) target = $region28
      $region27: #{siamrpn_forward.2} parent=23 // pred_region
        %s131 = smul.u32 32, %s9
        %p132 = scmp.lt.s32.totalorder %s131, 63
        %s133 = scalar_select %p132, %s131, 63
        %s134 = smul.addr %s133, 4
        %s135 = scalar_lea.vmem %s0, %s134
        %s136 = smul.u32 32, %s9
      $region28: #{siamrpn_forward.2} parent=23 // pred_fallthru
        _
    $region24: #{siamrpn_forward.2} parent=5 // pred_fallthru
      _
    %p137 = scmp.le.s32.totalorder 1, %s9
    %p138 = scmp.lt.s32.totalorder %s9, 3
    %p139 = pnand %p137, %p138
    %p140 = pneg %p139
    // Predicated region
    $region29: #{siamrpn_forward.2} parent=5 // pred_check
      _
    $region30: #{siamrpn_forward.2} parent=5 // pred_check_branch
      %142 = sbr.rel (%p139) target = $region32
    $region31: #{siamrpn_forward.2} parent=5 // pred_region
      %s143 = ssub.s32 %s9, 1
      %s144 = smul.u32 32, %s14
      %p145 = scmp.lt.s32.totalorder %s144, 63
      %s146 = scalar_select %p145, %s144, 63
      %s147 = smul.addr %s146, 4
      %s148 = scalar_lea.vmem %s0, %s147
      %p149 = pneg %p35
      %p150 = pneg %p32
      %p151 = pneg %p56
      %p152 = pneg %p53
      %p153 = pneg %p77
      %p154 = pneg %p74
      %p155 = pneg %p103
      %p156 = pneg %p100
      %s157 = smul.u32 32, %s14
      %p158 = scmp.lt.s32.totalorder %s157, 63
      %s159 = scalar_select %p158, %s157, 63
      %s160 = smul.addr %s159, 8
      %s161 = scalar_lea.vmem %s3, %s160
      %s162 = smul.u32 32, %s14
      %p163 = scmp.lt.s32.totalorder %s162, 63
      %s164 = scalar_select %p163, %s162, 63
      %s165 = smul.addr %s164, 4
      %s166 = scalar_lea.vmem %s0, %s165
      %s167 = smul.u32 32, %s14
      %s168 = smul.u32 32, %s14
      %p169 = scmp.lt.s32.totalorder %s168, 63
      %s170 = scalar_select %p169, %s168, 63
      %s171 = smul.addr %s170, 8
      %s172 = scalar_lea.vmem %s3, %s171
      %s173 = smul.u32 32, %s14
      %v175 = vld [vmem:[%s166] sm:$0xf]
      %v176 = vld [vmem:[%s166 + $0x4] sm:$0xf]
      %v177 = vld [vmem:[%s166 + $0x8] sm:$0xf]
      %v178 = vld [vmem:[%s166 + $0xc] sm:$0xf]
      %v179 = vld [vmem:[%s166 + $0x10] sm:$0xf]
      %v180 = vld [vmem:[%s166 + $0x14] sm:$0xf]
      %v181 = vld [vmem:[%s166 + $0x18] sm:$0xf]
      %v182 = vld [vmem:[%s166 + $0x1c] sm:$0xf]
      %v183 = vld [vmem:[%s166 + $0x20] sm:$0xf]
      %v184 = vld [vmem:[%s166 + $0x24] sm:$0xf]
      %v185 = vld [vmem:[%s166 + $0x28] sm:$0xf]
      %v186 = vld [vmem:[%s166 + $0x2c] sm:$0xf]
      %v187 = vld [vmem:[%s166 + $0x30] sm:$0xf]
      %v188 = vld [vmem:[%s166 + $0x34] sm:$0xf]
      %v189 = vld [vmem:[%s166 + $0x38] sm:$0xf]
      %v190 = vld [vmem:[%s166 + $0x3c] sm:$0xf]
      %v191 = vld [vmem:[%s166 + $0x40] sm:$0xf]
      %v192 = vld [vmem:[%s166 + $0x44] sm:$0xf]
      %v193 = vld [vmem:[%s166 + $0x48] sm:$0xf]
      %v194 = vld [vmem:[%s166 + $0x4c] sm:$0xf]
      %v195 = vld [vmem:[%s166 + $0x50] sm:$0xf]
      %v196 = vld [vmem:[%s166 + $0x54] sm:$0xf]
      %v197 = vld [vmem:[%s166 + $0x58] sm:$0xf]
      %v198 = vld [vmem:[%s166 + $0x5c] sm:$0xf]
      %v199 = vld [vmem:[%s166 + $0x60] sm:$0xf]
      %v200 = vld [vmem:[%s166 + $0x64] sm:$0xf]
      %v201 = vld [vmem:[%s166 + $0x68] sm:$0xf]
      %v202 = vld [vmem:[%s166 + $0x6c] sm:$0xf]
      %v203 = vld [vmem:[%s166 + $0x70] sm:$0xf]
      %v204 = vld [vmem:[%s166 + $0x74] sm:$0xf]
      %v205 = vld [vmem:[%s166 + $0x78] sm:$0xf]
      %v206 = vld [vmem:[%s166 + $0x7c] sm:$0xf]
      %v207 = vld [vmem:[%s1] sm:$0xf]
      %v208 = vld [vmem:[%s1 + $0x4] sm:$0xf]
      %v209 = vld [vmem:[%s1 + $0x8] sm:$0xf]
      %v210 = vld [vmem:[%s1 + $0xc] sm:$0xf]
      %v211 = vld [vmem:[%s1 + $0x10] sm:$0xf]
      %v212 = vld [vmem:[%s1 + $0x14] sm:$0xf]
      %v213 = vld [vmem:[%s1 + $0x18] sm:$0xf]
      %v214 = vld [vmem:[%s1 + $0x1c] sm:$0xf]
      %v215 = vld [vmem:[%s1 + $0x20] sm:$0xf]
      %v216 = vld [vmem:[%s1 + $0x24] sm:$0xf]
      %v217 = vld [vmem:[%s1 + $0x28] sm:$0xf]
      %v218 = vld [vmem:[%s1 + $0x2c] sm:$0xf]
      %v219 = vld [vmem:[%s1 + $0x30] sm:$0xf]
      %v220 = vld [vmem:[%s1 + $0x34] sm:$0xf]
      %v221 = vld [vmem:[%s1 + $0x38] sm:$0xf]
      %v222 = vld [vmem:[%s1 + $0x3c] sm:$0xf]
      %v223 = vld [vmem:[%s2] sm:$0x1]
      %v225 = vlaneseq
      %v226 = vshrl.u32 %v225, 7
      %v227 = vsub.s32 0, %v226
      %v228 = vrot.slane %v223, %v227
      %v262 = vunpack.c.l.b16 %v175
      %v263 = vunpack.c.l.b16 %v176
      %v264 = vunpack.c.l.b16 %v177
      %v265 = vunpack.c.l.b16 %v178
      %v266 = vunpack.c.l.b16 %v179
      %v267 = vunpack.c.l.b16 %v180
      %v268 = vunpack.c.l.b16 %v181
      %v269 = vunpack.c.l.b16 %v182
      %v270 = vunpack.c.l.b16 %v183
      %v271 = vunpack.c.l.b16 %v184
      %v272 = vunpack.c.l.b16 %v185
      %v273 = vunpack.c.l.b16 %v186
      %v274 = vunpack.c.l.b16 %v187
      %v275 = vunpack.c.l.b16 %v188
      %v276 = vunpack.c.l.b16 %v189
      %v277 = vunpack.c.l.b16 %v190
      %v278 = vunpack.c.l.b16 %v191
      %v279 = vunpack.c.l.b16 %v192
      %v280 = vunpack.c.l.b16 %v193
      %v281 = vunpack.c.l.b16 %v194
      %v282 = vunpack.c.l.b16 %v195
      %v283 = vunpack.c.l.b16 %v196
      %v284 = vunpack.c.l.b16 %v197
      %v285 = vunpack.c.l.b16 %v198
      %v286 = vunpack.c.l.b16 %v199
      %v287 = vunpack.c.l.b16 %v200
      %v288 = vunpack.c.l.b16 %v201
      %v289 = vunpack.c.l.b16 %v202
      %v290 = vunpack.c.l.b16 %v203
      %v291 = vunpack.c.l.b16 %v204
      %v292 = vunpack.c.l.b16 %v205
      %v293 = vunpack.c.l.b16 %v206
      %v294 = vpack.c.b16 %v263, %v262
      %v295 = vpack.c.b16 %v265, %v264
      %v296 = vpack.c.b16 %v267, %v266
      %v297 = vpack.c.b16 %v269, %v268
      %v298 = vpack.c.b16 %v271, %v270
      %v299 = vpack.c.b16 %v273, %v272
      %v300 = vpack.c.b16 %v275, %v274
      %v301 = vpack.c.b16 %v277, %v276
      %v302 = vpack.c.b16 %v279, %v278
      %v303 = vpack.c.b16 %v281, %v280
      %v304 = vpack.c.b16 %v283, %v282
      %v305 = vpack.c.b16 %v285, %v284
      %v306 = vpack.c.b16 %v287, %v286
      %v307 = vpack.c.b16 %v289, %v288
      %v308 = vpack.c.b16 %v291, %v290
      %v309 = vpack.c.b16 %v293, %v292
      %v342 = vunpack.c.l.b16 %v207
      %v343 = vunpack.c.l.b16 %v208
      %v344 = vunpack.c.l.b16 %v209
      %v345 = vunpack.c.l.b16 %v210
      %v346 = vunpack.c.l.b16 %v211
      %v347 = vunpack.c.l.b16 %v212
      %v348 = vunpack.c.l.b16 %v213
      %v349 = vunpack.c.l.b16 %v214
      %v350 = vunpack.c.l.b16 %v215
      %v351 = vunpack.c.l.b16 %v216
      %v352 = vunpack.c.l.b16 %v217
      %v353 = vunpack.c.l.b16 %v218
      %v354 = vunpack.c.l.b16 %v219
      %v355 = vunpack.c.l.b16 %v220
      %v356 = vunpack.c.l.b16 %v221
      %v357 = vunpack.c.l.b16 %v222
      %v358 = vpack.c.b16 %v343, %v342
      %v359 = vpack.c.b16 %v345, %v344
      %v360 = vpack.c.b16 %v347, %v346
      %v361 = vpack.c.b16 %v349, %v348
      %v362 = vpack.c.b16 %v351, %v350
      %v363 = vpack.c.b16 %v353, %v352
      %v364 = vpack.c.b16 %v355, %v354
      %v365 = vpack.c.b16 %v357, %v356
      %374 = vmatprep.subr.bf16.mxu0 0
      %375 = vmatpush1.bf16.msra.mxu0 %v358
      %376 = vmatprep.subr.bf16.mxu0 0
      %377 = vmatpush1.bf16.msra.mxu0 %v359
      %378 = vmatprep.subr.bf16.mxu0 0
      %379 = vmatpush1.bf16.msra.mxu0 %v360
      %380 = vmatprep.subr.bf16.mxu0 0
      %381 = vmatpush1.bf16.msra.mxu0 %v361
      %382 = vmatprep.subr.bf16.mxu0 0
      %383 = vmatpush1.bf16.msra.mxu0 %v362
      %384 = vmatprep.subr.bf16.mxu0 0
      %385 = vmatpush1.bf16.msra.mxu0 %v363
      %386 = vmatprep.subr.bf16.mxu0 0
      %387 = vmatpush1.bf16.msra.mxu0 %v364
      %388 = vmatprep.subr.bf16.mxu0 0
      %389 = vmatpush1.bf16.msra.mxu0 %v365
      %390 = vmatprep.subr.bf16.mxu0 0
      %391 = vmatpush1.bf16.msra.mxu0 0
      %392 = vmatprep.subr.bf16.mxu0 0
      %393 = vmatpush1.bf16.msra.mxu0 0
      %394 = vmatprep.subr.bf16.mxu0 0
      %395 = vmatpush1.bf16.msra.mxu0 0
      %396 = vmatprep.subr.bf16.mxu0 0
      %397 = vmatpush1.bf16.msra.mxu0 0
      %398 = vmatprep.subr.bf16.mxu0 0
      %399 = vmatpush1.bf16.msra.mxu0 0
      %400 = vmatprep.subr.bf16.mxu0 0
      %401 = vmatpush1.bf16.msra.mxu0 0
      %402 = vmatprep.subr.bf16.mxu0 0
      %403 = vmatpush1.bf16.msra.mxu0 0
      %404 = vmatprep.subr.bf16.mxu0 0
      %405 = vmatpush1.bf16.msra.mxu0 0
      %406 = vmatprep.mubr.bf16.mxu0 0
      %407 = vmatmul.mubr.bf16.gmra.mrb[0].mxu0 %v294
      %v408 = vpop.f32.mrb[0].mxu0
      %v409 = vadd.f32 %v228, %v408
      %v410 = vpop.f32.mrb[0].mxu0
      %v411 = vpop.f32.mrb[0].mxu0
      %v412 = vadd.f32 %v228, %v411
      %v413 = vpop.f32.mrb[0].mxu0
      %414 = vmatprep.mubr.bf16.mxu0 0
      %415 = vmatmul.mubr.bf16.gmra.mrb[0].mxu0 %v295
      %v416 = vpop.f32.mrb[0].mxu0
      %v417 = vadd.f32 %v228, %v416
      %v418 = vpop.f32.mrb[0].mxu0
      %v419 = vpop.f32.mrb[0].mxu0
      %v420 = vadd.f32 %v228, %v419
      %v421 = vpop.f32.mrb[0].mxu0
      %422 = vmatprep.mubr.bf16.mxu0 0
      %423 = vmatmul.mubr.bf16.gmra.mrb[0].mxu0 %v296
      %v424 = vpop.f32.mrb[0].mxu0
      %v425 = vadd.f32 %v228, %v424
      %v426 = vpop.f32.mrb[0].mxu0
      %v427 = vpop.f32.mrb[0].mxu0
      %v428 = vadd.f32 %v228, %v427
      %v429 = vpop.f32.mrb[0].mxu0
      %430 = vmatprep.mubr.bf16.mxu0 0
      %431 = vmatmul.mubr.bf16.gmra.mrb[0].mxu0 %v297
      %v432 = vpop.f32.mrb[0].mxu0
      %v433 = vadd.f32 %v228, %v432
      %v434 = vpop.f32.mrb[0].mxu0
      %v435 = vpop.f32.mrb[0].mxu0
      %v436 = vadd.f32 %v228, %v435
      %v437 = vpop.f32.mrb[0].mxu0
      %438 = vmatprep.mubr.bf16.mxu0 0
      %439 = vmatmul.mubr.bf16.gmra.mrb[0].mxu0 %v298
      %v440 = vpop.f32.mrb[0].mxu0
      %v441 = vadd.f32 %v228, %v440
      %v442 = vpop.f32.mrb[0].mxu0
      %v443 = vpop.f32.mrb[0].mxu0
      %v444 = vadd.f32 %v228, %v443
      %v445 = vpop.f32.mrb[0].mxu0
      %446 = vmatprep.mubr.bf16.mxu0 0
      %447 = vmatmul.mubr.bf16.gmra.mrb[0].mxu0 %v299
      %v448 = vpop.f32.mrb[0].mxu0
      %v449 = vadd.f32 %v228, %v448
      %v450 = vpop.f32.mrb[0].mxu0
      %v451 = vpop.f32.mrb[0].mxu0
      %v452 = vadd.f32 %v228, %v451
      %v453 = vpop.f32.mrb[0].mxu0
      %454 = vmatprep.mubr.bf16.mxu0 0
      %455 = vmatmul.mubr.bf16.gmra.mrb[0].mxu0 %v300
      %v456 = vpop.f32.mrb[0].mxu0
      %v457 = vadd.f32 %v228, %v456
      %v458 = vpop.f32.mrb[0].mxu0
      %v459 = vpop.f32.mrb[0].mxu0
      %v460 = vadd.f32 %v228, %v459
      %v461 = vpop.f32.mrb[0].mxu0
      %462 = vmatprep.mubr.bf16.mxu0 0
      %463 = vmatmul.mubr.bf16.gmra.mrb[0].mxu0 %v301
      %v464 = vpop.f32.mrb[0].mxu0
      %v465 = vadd.f32 %v228, %v464
      %v466 = vpop.f32.mrb[0].mxu0
      %v467 = vpop.f32.mrb[0].mxu0
      %v468 = vadd.f32 %v228, %v467
      %v469 = vpop.f32.mrb[0].mxu0
      %470 = vmatprep.mubr.bf16.mxu0 0
      %471 = vmatmul.mubr.bf16.gmra.mrb[0].mxu0 %v302
      %v472 = vpop.f32.mrb[0].mxu0
      %v473 = vadd.f32 %v228, %v472
      %v474 = vpop.f32.mrb[0].mxu0
      %v475 = vpop.f32.mrb[0].mxu0
      %v476 = vadd.f32 %v228, %v475
      %v477 = vpop.f32.mrb[0].mxu0
      %478 = vmatprep.mubr.bf16.mxu0 0
      %479 = vmatmul.mubr.bf16.gmra.mrb[0].mxu0 %v303
      %v480 = vpop.f32.mrb[0].mxu0
      %v481 = vadd.f32 %v228, %v480
      %v482 = vpop.f32.mrb[0].mxu0
      %v483 = vpop.f32.mrb[0].mxu0
      %v484 = vadd.f32 %v228, %v483
      %v485 = vpop.f32.mrb[0].mxu0
      %486 = vmatprep.mubr.bf16.mxu0 0
      %487 = vmatmul.mubr.bf16.gmra.mrb[0].mxu0 %v304
      %v488 = vpop.f32.mrb[0].mxu0
      %v489 = vadd.f32 %v228, %v488
      %v490 = vpop.f32.mrb[0].mxu0
      %v491 = vpop.f32.mrb[0].mxu0
      %v492 = vadd.f32 %v228, %v491
      %v493 = vpop.f32.mrb[0].mxu0
      %494 = vmatprep.mubr.bf16.mxu0 0
      %495 = vmatmul.mubr.bf16.gmra.mrb[0].mxu0 %v305
      %v496 = vpop.f32.mrb[0].mxu0
      %v497 = vadd.f32 %v228, %v496
      %v498 = vpop.f32.mrb[0].mxu0
      %v499 = vpop.f32.mrb[0].mxu0
      %v500 = vadd.f32 %v228, %v499
      %v501 = vpop.f32.mrb[0].mxu0
      %502 = vmatprep.mubr.bf16.mxu0 0
      %503 = vmatmul.mubr.bf16.gmra.mrb[0].mxu0 %v306
      %v504 = vpop.f32.mrb[0].mxu0
      %v505 = vadd.f32 %v228, %v504
      %v506 = vpop.f32.mrb[0].mxu0
      %v507 = vpop.f32.mrb[0].mxu0
      %v508 = vadd.f32 %v228, %v507
      %v509 = vpop.f32.mrb[0].mxu0
      %510 = vmatprep.mubr.bf16.mxu0 0
      %511 = vmatmul.mubr.bf16.gmra.mrb[0].mxu0 %v307
      %v512 = vpop.f32.mrb[0].mxu0
      %v513 = vadd.f32 %v228, %v512
      %v514 = vpop.f32.mrb[0].mxu0
      %v515 = vpop.f32.mrb[0].mxu0
      %v516 = vadd.f32 %v228, %v515
      %v517 = vpop.f32.mrb[0].mxu0
      %518 = vmatprep.mubr.bf16.mxu0 0
      %519 = vmatmul.mubr.bf16.gmra.mrb[0].mxu0 %v308
      %v520 = vpop.f32.mrb[0].mxu0
      %v521 = vadd.f32 %v228, %v520
      %v522 = vpop.f32.mrb[0].mxu0
      %v523 = vpop.f32.mrb[0].mxu0
      %v524 = vadd.f32 %v228, %v523
      %v525 = vpop.f32.mrb[0].mxu0
      %526 = vmatprep.mubr.bf16.mxu0 0
      %527 = vmatmul.mubr.bf16.gmra.mrb[0].mxu0 %v309
      %v528 = vpop.f32.mrb[0].mxu0
      %v529 = vadd.f32 %v228, %v528
      %v530 = vpop.f32.mrb[0].mxu0
      %v531 = vpop.f32.mrb[0].mxu0
      %v532 = vadd.f32 %v228, %v531
      %v533 = vpop.f32.mrb[0].mxu0
      %534 = vdwg.mxu0
      %v535 = vmax.f32 %v409, 0.0
      %v536 = vmax.f32 %v412, 0.0
      %v537 = vmax.f32 %v417, 0.0
      %v538 = vmax.f32 %v420, 0.0
      %v539 = vmax.f32 %v425, 0.0
      %v540 = vmax.f32 %v428, 0.0
      %v541 = vmax.f32 %v433, 0.0
      %v542 = vmax.f32 %v436, 0.0
      %v543 = vmax.f32 %v441, 0.0
      %v544 = vmax.f32 %v444, 0.0
      %v545 = vmax.f32 %v449, 0.0
      %v546 = vmax.f32 %v452, 0.0
      %v547 = vmax.f32 %v457, 0.0
      %v548 = vmax.f32 %v460, 0.0
      %v549 = vmax.f32 %v465, 0.0
      %v550 = vmax.f32 %v468, 0.0
      %v551 = vmax.f32 %v473, 0.0
      %v552 = vmax.f32 %v476, 0.0
      %v553 = vmax.f32 %v481, 0.0
      %v554 = vmax.f32 %v484, 0.0
      %v555 = vmax.f32 %v489, 0.0
      %v556 = vmax.f32 %v492, 0.0
      %v557 = vmax.f32 %v497, 0.0
      %v558 = vmax.f32 %v500, 0.0
      %v559 = vmax.f32 %v505, 0.0
      %v560 = vmax.f32 %v508, 0.0
      %v561 = vmax.f32 %v513, 0.0
      %v562 = vmax.f32 %v516, 0.0
      %v563 = vmax.f32 %v521, 0.0
      %v564 = vmax.f32 %v524, 0.0
      %v565 = vmax.f32 %v529, 0.0
      %v566 = vmax.f32 %v532, 0.0
      %567 = vst [vmem:[%s172] sm:$0xff] %v535
      %568 = vst [vmem:[%s172 + $0x8] sm:$0xff] %v536
      %569 = vst [vmem:[%s172 + $0x10] sm:$0xff] %v537
      %570 = vst [vmem:[%s172 + $0x18] sm:$0xff] %v538
      %571 = vst [vmem:[%s172 + $0x20] sm:$0xff] %v539
      %572 = vst [vmem:[%s172 + $0x28] sm:$0xff] %v540
      %573 = vst [vmem:[%s172 + $0x30] sm:$0xff] %v541
      %574 = vst [vmem:[%s172 + $0x38] sm:$0xff] %v542
      %575 = vst [vmem:[%s172 + $0x40] sm:$0xff] %v543
      %576 = vst [vmem:[%s172 + $0x48] sm:$0xff] %v544
      %577 = vst [vmem:[%s172 + $0x50] sm:$0xff] %v545
      %578 = vst [vmem:[%s172 + $0x58] sm:$0xff] %v546
      %579 = vst [vmem:[%s172 + $0x60] sm:$0xff] %v547
      %580 = vst [vmem:[%s172 + $0x68] sm:$0xff] %v548
      %581 = vst [vmem:[%s172 + $0x70] sm:$0xff] %v549
      %582 = vst [vmem:[%s172 + $0x78] sm:$0xff] %v550
      %583 = vst [vmem:[%s172 + $0x80] sm:$0xff] %v551
      %584 = vst [vmem:[%s172 + $0x88] sm:$0xff] %v552
      %585 = vst [vmem:[%s172 + $0x90] sm:$0xff] %v553
      %586 = vst [vmem:[%s172 + $0x98] sm:$0xff] %v554
      %587 = vst [vmem:[%s172 + $0xa0] sm:$0xff] %v555
      %588 = vst [vmem:[%s172 + $0xa8] sm:$0xff] %v556
      %589 = vst [vmem:[%s172 + $0xb0] sm:$0xff] %v557
      %590 = vst [vmem:[%s172 + $0xb8] sm:$0xff] %v558
      %591 = vst [vmem:[%s172 + $0xc0] sm:$0xff] %v559
      %592 = vst [vmem:[%s172 + $0xc8] sm:$0xff] %v560
      %593 = vst [vmem:[%s172 + $0xd0] sm:$0xff] %v561
      %594 = vst [vmem:[%s172 + $0xd8] sm:$0xff] %v562
      %595 = vst [vmem:[%s172 + $0xe0] sm:$0xff] %v563
      %596 = vst [vmem:[%s172 + $0xe8] sm:$0xff] %v564
      %597 = vst [vmem:[%s172 + $0xf0] sm:$0xff] %v565
      %598 = vst [vmem:[%s172 + $0xf8] sm:$0xff] %v566
      %s599 = smul.u32 32, %s14
      %p600 = scmp.lt.s32.totalorder %s599, 63
      %s601 = scalar_select %p600, %s599, 63
      %s602 = smul.addr %s601, 8
      %s603 = scalar_lea.vmem %s3, %s602
      // Predicated region
      $region33: #{siamrpn_forward.2} parent=31 // pred_check
        %p604 = pneg %p100
      $region34: #{siamrpn_forward.2} parent=31 // pred_check_branch
        %606 = sbr.rel (%p604) target = $region36
      $region35: #{siamrpn_forward.2} parent=31 // pred_region
        %s607 = smul.u32 32, %s14
      $region36: #{siamrpn_forward.2} parent=31 // pred_fallthru
        _
    $region32: #{siamrpn_forward.2} parent=5 // pred_fallthru
      _
    %p608 = scmp.le.s32.totalorder 2, %s9
    // Predicated region
    $region37: #{siamrpn_forward.2} parent=5 // pred_check
      %p609 = pneg %p608
    $region38: #{siamrpn_forward.2} parent=5 // pred_check_branch
      %611 = sbr.rel (%p609) target = $region40
    $region39: #{siamrpn_forward.2} parent=5 // pred_region
      %s612 = ssub.s32 %s9, 2
      // Predicated region
      $region41: #{siamrpn_forward.2} parent=39 // pred_check
        %p613 = pneg %p106
      $region42: #{siamrpn_forward.2} parent=39 // pred_check_branch
        %615 = sbr.rel (%p613) target = $region44
      $region43: #{siamrpn_forward.2} parent=39 // pred_region
        %s616 = smul.u32 32, %s15
        %p617 = scmp.lt.s32.totalorder %s616, 63
        %s618 = scalar_select %p617, %s616, 63
        %s619 = smul.addr %s618, 8
        %s620 = scalar_lea.vmem %s3, %s619
      $region44: #{siamrpn_forward.2} parent=39 // pred_fallthru
        _
    $region40: #{siamrpn_forward.2} parent=5 // pred_fallthru
      _
  $region6: #{siamrpn_forward.2} parent=0 // loop_footer
    %s13 = sadd.s32 1, %s9
  $region7: #{siamrpn_forward.2} parent=0 // loop_footer_branch
    %8 = sbr.rel target = $region3
  $region8: #{siamrpn_forward.2} parent=0 // loop_exit
    _

// kernel: siamrpn_forward.3
$region0: #{siamrpn_forward.3}
  #allocation0 [shape = 'u32[]', space=smem, size = 0x4, offset = 0x4, fixed_abs, tag = 'smem constant byte address 0x4 - core index']
  #allocation1 [shape = 'u32[144,128]{1,0:T(1,128)}', space=vmem, size = 0x12000, scoped, tag = 'internal scratch']
  %s0 = inlined_call_operand.vmem [shape: bf16[2,48,576], index: 0, kind: input, shape index: {}]
  %s1 = inlined_call_operand.vmem [shape: bf16[2,576,128], index: 1, kind: input, shape index: {}]
  %s2 = inlined_call_operand.vmem [shape: f32[48,128], index: 2, kind: input, shape index: {}]
  %s3 = inlined_call_operand.vmem [shape: s32[2,8,128], index: 3, kind: input, shape index: {}]
  %s4 = inlined_call_operand.vmem [shape: f32[2,32,128], index: 4, kind: input, shape index: {}]
  %s5 = inlined_call_operand.vmem [shape: f32[2,32,128], index: 5, kind: input, shape index: {}]
  %s6 = inlined_call_operand.vmem [shape: f32[2,1,128], index: 6, kind: output, shape index: {}]
  %s7 = sld [smem:[#allocation0]]
  $region57: #{siamrpn_forward.3} parent=0
    _
  %s9 = ssub.s32 1, %s7
  %s10 = scalar_select 0, %s9, %s7
  loop: start=0, step=1, limit=4
  $region2: #{siamrpn_forward.3} parent=0 // loop_pre_header
    _
  $region3: #{siamrpn_forward.3} parent=0 // loop_header
    %s12 = sphi 0, %s16
    %p13 = scmp.ge.s32.totalorder %s12, 4
    %s22 = sphi 0, %s24
    %s25 = sphi 0, %s22
    %s26 = sphi 0, %s25
    %s42 = sphi 0, %s26
    %s48 = sphi 0, %s50
    %s51 = sphi 0, %s48
    %s52 = sphi 0, %s51
    %s68 = sphi 0, %s52
    %s72 = sphi 0, %s72
    %s74 = sphi 0, %s72
    %s75 = sphi 0, %s74
    %s89 = sphi 0, %s75
    %s95 = sphi 0, %s97
    %s98 = sphi 0, %s95
    %s99 = sphi 0, %s98
    %s115 = sphi 0, %s99
    %s121 = sphi 0, %s123
    %s124 = sphi 0, %s121
    %s125 = sphi 0, %s124
    %s141 = sphi 0, %s125
    %s147 = sphi 0, %s149
    %s150 = sphi 0, %s147
    %s151 = sphi 0, %s150
    %s167 = sphi 0, %s151
    %s173 = sphi 0, %s175
    %s176 = sphi 0, %s173
    %s177 = sphi 0, %s176
    %s193 = sphi 0, %s177
  $region4: #{siamrpn_forward.3} parent=0 // loop_header_branch
    %15 = sbr.rel (%p13) target = $region8
  $region5: #{siamrpn_forward.3} parent=0 // loop_body
    %s17 = ssub.s32 %s12, 1
    %s18 = ssub.s32 %s12, 2
    %s19 = sadd.s32 %s12, 1
    %s20 = ssub.s32 %s12, %s19
    %p21 = scmp.eq.s32.totalorder %s20, 0
    %s23 = sadd.s32 %s22, 1
    %s24 = scalar_select %p21, %s22, %s23
    %p27 = pneg %p21
    %p28 = scmp.eq.s32.totalorder %s12, 1
    %p29 = por %p27, %p28
    %p30 = scmp.ne.s32.totalorder %s22, %s25
    %p31 = scmp.eq.s32.totalorder %s12, 0
    %p32 = por %p30, %p31
    %p33 = scmp.ne.s32.totalorder %s22, %s25
    %p34 = scmp.eq.s32.totalorder %s17, 1
    %p35 = por %p33, %p34
    %p36 = scmp.ne.s32.totalorder %s25, %s26
    %p37 = scmp.eq.s32.totalorder %s17, 0
    %p38 = por %p36, %p37
    %p39 = scmp.ne.s32.totalorder %s25, %s26
    %p40 = scmp.eq.s32.totalorder %s18, 1
    %p41 = por %p39, %p40
    %p43 = scmp.ne.s32.totalorder %s26, %s42
    %p44 = scmp.eq.s32.totalorder %s18, 0
    %p45 = por %p43, %p44
    %s46 = ssub.s32 %s12, %s19
    %p47 = scmp.eq.s32.totalorder %s46, 0
    %s49 = sadd.s32 %s48, 1
    %s50 = scalar_select %p47, %s48, %s49
    %p53 = pneg %p47
    %p54 = scmp.eq.s32.totalorder %s12, 1
    %p55 = por %p53, %p54
    %p56 = scmp.ne.s32.totalorder %s48, %s51
    %p57 = scmp.eq.s32.totalorder %s12, 0
    %p58 = por %p56, %p57
    %p59 = scmp.ne.s32.totalorder %s48, %s51
    %p60 = scmp.eq.s32.totalorder %s17, 1
    %p61 = por %p59, %p60
    %p62 = scmp.ne.s32.totalorder %s51, %s52
    %p63 = scmp.eq.s32.totalorder %s17, 0
    %p64 = por %p62, %p63
    %p65 = scmp.ne.s32.totalorder %s51, %s52
    %p66 = scmp.eq.s32.totalorder %s18, 1
    %p67 = por %p65, %p66
    %p69 = scmp.ne.s32.totalorder %s52, %s68
    %p70 = scmp.eq.s32.totalorder %s18, 0
    %p71 = por %p69, %p70
    %s73 = sadd.s32 %s72, 1
    %p76 = scmp.eq.s32.totalorder %s12, 1
    %p77 = scmp.ne.s32.totalorder %s72, %s74
    %p78 = scmp.eq.s32.totalorder %s12, 0
    %p79 = por %p77, %p78
    %p80 = scmp.ne.s32.totalorder %s72, %s74
    %p81 = scmp.eq.s32.totalorder %s17, 1
    %p82 = por %p80, %p81
    %p83 = scmp.ne.s32.totalorder %s74, %s75
    %p84 = scmp.eq.s32.totalorder %s17, 0
    %p85 = por %p83, %p84
    %p86 = scmp.ne.s32.totalorder %s74, %s75
    %p87 = scmp.eq.s32.totalorder %s18, 1
    %p88 = por %p86, %p87
    %p90 = scmp.ne.s32.totalorder %s75, %s89
    %p91 = scmp.eq.s32.totalorder %s18, 0
    %p92 = por %p90, %p91
    %s93 = ssub.s32 %s12, %s19
    %p94 = scmp.eq.s32.totalorder %s93, 0
    %s96 = sadd.s32 %s95, 1
    %s97 = scalar_select %p94, %s95, %s96
    %p100 = pneg %p94
    %p101 = scmp.eq.s32.totalorder %s12, 1
    %p102 = por %p100, %p101
    %p103 = scmp.ne.s32.totalorder %s95, %s98
    %p104 = scmp.eq.s32.totalorder %s12, 0
    %p105 = por %p103, %p104
    %p106 = scmp.ne.s32.totalorder %s95, %s98
    %p107 = scmp.eq.s32.totalorder %s17, 1
    %p108 = por %p106, %p107
    %p109 = scmp.ne.s32.totalorder %s98, %s99
    %p110 = scmp.eq.s32.totalorder %s17, 0
    %p111 = por %p109, %p110
    %p112 = scmp.ne.s32.totalorder %s98, %s99
    %p113 = scmp.eq.s32.totalorder %s18, 1
    %p114 = por %p112, %p113
    %p116 = scmp.ne.s32.totalorder %s99, %s115
    %p117 = scmp.eq.s32.totalorder %s18, 0
    %p118 = por %p116, %p117
    %s119 = ssub.s32 %s12, %s19
    %p120 = scmp.eq.s32.totalorder %s119, 0
    %s122 = sadd.s32 %s121, 1
    %s123 = scalar_select %p120, %s121, %s122
    %p126 = pneg %p120
    %p127 = scmp.eq.s32.totalorder %s12, 1
    %p128 = por %p126, %p127
    %p129 = scmp.ne.s32.totalorder %s121, %s124
    %p130 = scmp.eq.s32.totalorder %s12, 0
    %p131 = por %p129, %p130
    %p132 = scmp.ne.s32.totalorder %s121, %s124
    %p133 = scmp.eq.s32.totalorder %s17, 1
    %p134 = por %p132, %p133
    %p135 = scmp.ne.s32.totalorder %s124, %s125
    %p136 = scmp.eq.s32.totalorder %s17, 0
    %p137 = por %p135, %p136
    %p138 = scmp.ne.s32.totalorder %s124, %s125
    %p139 = scmp.eq.s32.totalorder %s18, 1
    %p140 = por %p138, %p139
    %p142 = scmp.ne.s32.totalorder %s125, %s141
    %p143 = scmp.eq.s32.totalorder %s18, 0
    %p144 = por %p142, %p143
    %s145 = ssub.s32 %s12, %s19
    %p146 = scmp.eq.s32.totalorder %s145, 0
    %s148 = sadd.s32 %s147, 1
    %s149 = scalar_select %p146, %s147, %s148
    %p152 = pneg %p146
    %p153 = scmp.eq.s32.totalorder %s12, 1
    %p154 = por %p152, %p153
    %p155 = scmp.ne.s32.totalorder %s147, %s150
    %p156 = scmp.eq.s32.totalorder %s12, 0
    %p157 = por %p155, %p156
    %p158 = scmp.ne.s32.totalorder %s147, %s150
    %p159 = scmp.eq.s32.totalorder %s17, 1
    %p160 = por %p158, %p159
    %p161 = scmp.ne.s32.totalorder %s150, %s151
    %p162 = scmp.eq.s32.totalorder %s17, 0
    %p163 = por %p161, %p162
    %p164 = scmp.ne.s32.totalorder %s150, %s151
    %p165 = scmp.eq.s32.totalorder %s18, 1
    %p166 = por %p164, %p165
    %p168 = scmp.ne.s32.totalorder %s151, %s167
    %p169 = scmp.eq.s32.totalorder %s18, 0
    %p170 = por %p168, %p169
    %s171 = ssub.s32 %s12, %s19
    %p172 = scmp.eq.s32.totalorder %s171, 0
    %s174 = sadd.s32 %s173, 1
    %s175 = scalar_select %p172, %s173, %s174
    %p178 = pneg %p172
    %p179 = scmp.eq.s32.totalorder %s12, 1
    %p180 = por %p178, %p179
    %p181 = scmp.ne.s32.totalorder %s173, %s176
    %p182 = scmp.eq.s32.totalorder %s12, 0
    %p183 = por %p181, %p182
    %p184 = scmp.ne.s32.totalorder %s173, %s176
    %p185 = scmp.eq.s32.totalorder %s17, 1
    %p186 = por %p184, %p185
    %p187 = scmp.ne.s32.totalorder %s176, %s177
    %p188 = scmp.eq.s32.totalorder %s17, 0
    %p189 = por %p187, %p188
    %p190 = scmp.ne.s32.totalorder %s176, %s177
    %p191 = scmp.eq.s32.totalorder %s18, 1
    %p192 = por %p190, %p191
    %p194 = scmp.ne.s32.totalorder %s177, %s193
    %p195 = scmp.eq.s32.totalorder %s18, 0
    %p196 = por %p194, %p195
    %p197 = scmp.le.s32.totalorder 1, %s12
    %p198 = scmp.lt.s32.totalorder %s12, 3
    %p199 = pnand %p197, %p198
    %p200 = pneg %p199
    // Predicated region
    $region9: #{siamrpn_forward.3} parent=5 // pred_check
      _
    $region10: #{siamrpn_forward.3} parent=5 // pred_check_branch
      %202 = sbr.rel (%p199) target = $region12
    $region11: #{siamrpn_forward.3} parent=5 // pred_region
      %s203 = ssub.s32 %s12, 1
      // Predicated region
      $region13: #{siamrpn_forward.3} parent=11 // pred_check
        %p204 = pneg %p85
      $region14: #{siamrpn_forward.3} parent=11 // pred_check_branch
        %206 = sbr.rel (%p204) target = $region16
      $region15: #{siamrpn_forward.3} parent=11 // pred_region
        _
      $region16: #{siamrpn_forward.3} parent=11 // pred_fallthru
        _
    $region12: #{siamrpn_forward.3} parent=5 // pred_fallthru
      _
    %p207 = scmp.lt.s32.totalorder %s12, 2
    // Predicated region
    $region17: #{siamrpn_forward.3} parent=5 // pred_check
      %p208 = pneg %p207
    $region18: #{siamrpn_forward.3} parent=5 // pred_check_branch
      %210 = sbr.rel (%p208) target = $region20
    $region19: #{siamrpn_forward.3} parent=5 // pred_region
      // Predicated region
      $region21: #{siamrpn_forward.3} parent=19 // pred_check
        %p211 = pneg %p32
      $region22: #{siamrpn_forward.3} parent=19 // pred_check_branch
        %213 = sbr.rel (%p211) target = $region24
      $region23: #{siamrpn_forward.3} parent=19 // pred_region
        %p214 = scmp.lt.s32.totalorder %s12, 1
        %s215 = scalar_select %p214, %s12, 1
        %s216 = smul.addr %s215, 30
        %s217 = smul.addr %s216, 4
        %s218 = scalar_lea.vmem %s0, %s217
      $region24: #{siamrpn_forward.3} parent=19 // pred_fallthru
        _
      // Predicated region
      $region25: #{siamrpn_forward.3} parent=19 // pred_check
        %p219 = pneg %p58
      $region26: #{siamrpn_forward.3} parent=19 // pred_check_branch
        %221 = sbr.rel (%p219) target = $region28
      $region27: #{siamrpn_forward.3} parent=19 // pred_region
        %p222 = scmp.lt.s32.totalorder %s12, 1
        %s223 = scalar_select %p222, %s12, 1
        %s224 = smul.addr %s223, 72
        %s225 = smul.addr %s224, 4
        %s226 = scalar_lea.vmem %s1, %s225
      $region28: #{siamrpn_forward.3} parent=19 // pred_fallthru
        _
      // Predicated region
      $region29: #{siamrpn_forward.3} parent=19 // pred_check
        %p227 = pneg %p105
      $region30: #{siamrpn_forward.3} parent=19 // pred_check_branch
        %229 = sbr.rel (%p227) target = $region32
      $region31: #{siamrpn_forward.3} parent=19 // pred_region
        %p230 = scmp.lt.s32.totalorder %s12, 1
        %s231 = scalar_select %p230, %s12, 1
        %s232 = smul.addr %s231, 8
        %s233 = scalar_lea.vmem %s3, %s232
      $region32: #{siamrpn_forward.3} parent=19 // pred_fallthru
        _
      // Predicated region
      $region33: #{siamrpn_forward.3} parent=19 // pred_check
        %p234 = pneg %p131
      $region34: #{siamrpn_forward.3} parent=19 // pred_check_branch
        %236 = sbr.rel (%p234) target = $region36
      $region35: #{siamrpn_forward.3} parent=19 // pred_region
        %p237 = scmp.lt.s32.totalorder %s12, 1
        %s238 = scalar_select %p237, %s12, 1
        %s239 = smul.addr %s238, 4
        %s240 = smul.addr %s239, 8
        %s241 = scalar_lea.vmem %s4, %s240
      $region36: #{siamrpn_forward.3} parent=19 // pred_fallthru
        _
      // Predicated region
      $region37: #{siamrpn_forward.3} parent=19 // pred_check
        %p242 = pneg %p157
      $region38: #{siamrpn_forward.3} parent=19 // pred_check_branch
        %244 = sbr.rel (%p242) target = $region40
      $region39: #{siamrpn_forward.3} parent=19 // pred_region
        %p245 = scmp.lt.s32.totalorder %s12, 1
        %s246 = scalar_select %p245, %s12, 1
        %s247 = smul.addr %s246, 4
        %s248 = smul.addr %s247, 8
        %s249 = scalar_lea.vmem %s5, %s248
      $region40: #{siamrpn_forward.3} parent=19 // pred_fallthru
        _
    $region20: #{siamrpn_forward.3} parent=5 // pred_fallthru
      _
    %p250 = scmp.le.s32.totalorder 1, %s12
    %p251 = scmp.lt.s32.totalorder %s12, 3
    %p252 = pnand %p250, %p251
    %p253 = pneg %p252
    // Predicated region
    $region41: #{siamrpn_forward.3} parent=5 // pred_check
      _
    $region42: #{siamrpn_forward.3} parent=5 // pred_check_branch
      %255 = sbr.rel (%p252) target = $region44
    $region43: #{siamrpn_forward.3} parent=5 // pred_region
      %s256 = ssub.s32 %s12, 1
      %p257 = scmp.lt.s32.totalorder %s17, 1
      %s258 = scalar_select %p257, %s17, 1
      %s259 = smul.addr %s258, 30
      %s260 = smul.addr %s259, 4
      %s261 = scalar_lea.vmem %s0, %s260
      %p262 = pneg %p38
      %p263 = pneg %p35
      %p264 = scmp.lt.s32.totalorder %s17, 1
      %s265 = scalar_select %p264, %s17, 1
      %s266 = smul.addr %s265, 72
      %s267 = smul.addr %s266, 4
      %s268 = scalar_lea.vmem %s1, %s267
      %p269 = pneg %p64
      %p270 = pneg %p61
      %p271 = pneg %p85
      %p272 = pneg %p82
      %p273 = scmp.lt.s32.totalorder %s17, 1
      %s274 = scalar_select %p273, %s17, 1
      %s275 = smul.addr %s274, 8
      %s276 = scalar_lea.vmem %s3, %s275
      %p277 = pneg %p111
      %p278 = pneg %p108
      %p279 = scmp.lt.s32.totalorder %s17, 1
      %s280 = scalar_select %p279, %s17, 1
      %s281 = smul.addr %s280, 4
      %s282 = smul.addr %s281, 8
      %s283 = scalar_lea.vmem %s4, %s282
      %p284 = pneg %p137
      %p285 = pneg %p134
      %p286 = scmp.lt.s32.totalorder %s17, 1
      %s287 = scalar_select %p286, %s17, 1
      %s288 = smul.addr %s287, 4
      %s289 = smul.addr %s288, 8
      %s290 = scalar_lea.vmem %s5, %s289
      %p291 = pneg %p163
      %p292 = pneg %p160
      %p293 = pneg %p189
      %p294 = pneg %p186
      %p295 = scmp.lt.s32.totalorder %s17, 1
      %s296 = scalar_select %p295, %s17, 1
      %s297 = scalar_lea.vmem %s6, %s296
      %p298 = scmp.lt.s32.totalorder %s17, 1
      %s299 = scalar_select %p298, %s17, 1
      %s300 = smul.addr %s299, 30
      %s301 = smul.addr %s300, 4
      %s302 = scalar_lea.vmem %s0, %s301
      %p303 = scmp.lt.s32.totalorder %s17, 1
      %s304 = scalar_select %p303, %s17, 1
      %s305 = smul.addr %s304, 72
      %s306 = smul.addr %s305, 4
      %s307 = scalar_lea.vmem %s1, %s306
      %p308 = scmp.lt.s32.totalorder %s17, 1
      %s309 = scalar_select %p308, %s17, 1
      %s310 = smul.addr %s309, 8
      %s311 = scalar_lea.vmem %s3, %s310
      %p312 = scmp.lt.s32.totalorder %s17, 1
      %s313 = scalar_select %p312, %s17, 1
      %s314 = smul.addr %s313, 4
      %s315 = smul.addr %s314, 8
      %s316 = scalar_lea.vmem %s4, %s315
      %p317 = scmp.lt.s32.totalorder %s17, 1
      %s318 = scalar_select %p317, %s17, 1
      %s319 = smul.addr %s318, 4
      %s320 = smul.addr %s319, 8
      %s321 = scalar_lea.vmem %s5, %s320
      %p322 = scmp.lt.s32.totalorder %s17, 1
      %s323 = scalar_select %p322, %s17, 1
      %s324 = scalar_lea.vmem %s6, %s323
      %v326 = vld [vmem:[%s302] sm:$0xff]
      %v327 = vld [vmem:[%s302 + $0x8] sm:$0xff]
      %v328 = vld [vmem:[%s302 + $0x10] sm:$0xf]
      %v329 = vld [vmem:[%s302 + $0x14] sm:$0xff]
      %v330 = vld [vmem:[%s302 + $0x1c] sm:$0xff]
      %v331 = vld [vmem:[%s302 + $0x24] sm:$0xf]
      %v332 = vld [vmem:[%s302 + $0x28] sm:$0xff]
      %v333 = vld [vmem:[%s302 + $0x30] sm:$0xff]
      %v334 = vld [vmem:[%s302 + $0x38] sm:$0xf]
      %v335 = vld [vmem:[%s302 + $0x3c] sm:$0xff]
      %v336 = vld [vmem:[%s302 + $0x44] sm:$0xff]
      %v337 = vld [vmem:[%s302 + $0x4c] sm:$0xf]
      %v338 = vld [vmem:[%s302 + $0x50] sm:$0xff]
      %v339 = vld [vmem:[%s302 + $0x58] sm:$0xff]
      %v340 = vld [vmem:[%s302 + $0x60] sm:$0xf]
      %v341 = vld [vmem:[%s302 + $0x64] sm:$0xff]
      %v342 = vld [vmem:[%s302 + $0x6c] sm:$0xff]
      %v343 = vld [vmem:[%s302 + $0x74] sm:$0xf]
      %v344 = vld [vmem:[%s307] sm:$0xf]
      %v345 = vld [vmem:[%s307 + $0x4] sm:$0xf]
      %v346 = vld [vmem:[%s307 + $0x8] sm:$0xf]
      %v347 = vld [vmem:[%s307 + $0xc] sm:$0xf]
      %v348 = vld [vmem:[%s307 + $0x10] sm:$0xf]
      %v349 = vld [vmem:[%s307 + $0x14] sm:$0xf]
      %v350 = vld [vmem:[%s307 + $0x18] sm:$0xf]
      %v351 = vld [vmem:[%s307 + $0x1c] sm:$0xf]
      %v352 = vld [vmem:[%s307 + $0x20] sm:$0xf]
      %v353 = vld [vmem:[%s307 + $0x24] sm:$0xf]
      %v354 = vld [vmem:[%s307 + $0x28] sm:$0xf]
      %v355 = vld [vmem:[%s307 + $0x2c] sm:$0xf]
      %v356 = vld [vmem:[%s307 + $0x30] sm:$0xf]
      %v357 = vld [vmem:[%s307 + $0x34] sm:$0xf]
      %v358 = vld [vmem:[%s307 + $0x38] sm:$0xf]
      %v359 = vld [vmem:[%s307 + $0x3c] sm:$0xf]
      %v360 = vld [vmem:[%s307 + $0x40] sm:$0xf]
      %v361 = vld [vmem:[%s307 + $0x44] sm:$0xf]
      %v362 = vld [vmem:[%s307 + $0x48] sm:$0xf]
      %v363 = vld [vmem:[%s307 + $0x4c] sm:$0xf]
      %v364 = vld [vmem:[%s307 + $0x50] sm:$0xf]
      %v365 = vld [vmem:[%s307 + $0x54] sm:$0xf]
      %v366 = vld [vmem:[%s307 + $0x58] sm:$0xf]
      %v367 = vld [vmem:[%s307 + $0x5c] sm:$0xf]
      %v368 = vld [vmem:[%s307 + $0x60] sm:$0xf]
      %v369 = vld [vmem:[%s307 + $0x64] sm:$0xf]
      %v370 = vld [vmem:[%s307 + $0x68] sm:$0xf]
      %v371 = vld [vmem:[%s307 + $0x6c] sm:$0xf]
      %v372 = vld [vmem:[%s307 + $0x70] sm:$0xf]
      %v373 = vld [vmem:[%s307 + $0x74] sm:$0xf]
      %v374 = vld [vmem:[%s307 + $0x78] sm:$0xf]
      %v375 = vld [vmem:[%s307 + $0x7c] sm:$0xf]
      %v376 = vld [vmem:[%s307 + $0x80] sm:$0xf]
      %v377 = vld [vmem:[%s307 + $0x84] sm:$0xf]
      %v378 = vld [vmem:[%s307 + $0x88] sm:$0xf]
      %v379 = vld [vmem:[%s307 + $0x8c] sm:$0xf]
      %v380 = vld [vmem:[%s307 + $0x90] sm:$0xf]
      %v381 = vld [vmem:[%s307 + $0x94] sm:$0xf]
      %v382 = vld [vmem:[%s307 + $0x98] sm:$0xf]
      %v383 = vld [vmem:[%s307 + $0x9c] sm:$0xf]
      %v384 = vld [vmem:[%s307 + $0xa0] sm:$0xf]
      %v385 = vld [vmem:[%s307 + $0xa4] sm:$0xf]
      %v386 = vld [vmem:[%s307 + $0xa8] sm:$0xf]
      %v387 = vld [vmem:[%s307 + $0xac] sm:$0xf]
      %v388 = vld [vmem:[%s307 + $0xb0] sm:$0xf]
      %v389 = vld [vmem:[%s307 + $0xb4] sm:$0xf]
      %v390 = vld [vmem:[%s307 + $0xb8] sm:$0xf]
      %v391 = vld [vmem:[%s307 + $0xbc] sm:$0xf]
      %v392 = vld [vmem:[%s307 + $0xc0] sm:$0xf]
      %v393 = vld [vmem:[%s307 + $0xc4] sm:$0xf]
      %v394 = vld [vmem:[%s307 + $0xc8] sm:$0xf]
      %v395 = vld [vmem:[%s307 + $0xcc] sm:$0xf]
      %v396 = vld [vmem:[%s307 + $0xd0] sm:$0xf]
      %v397 = vld [vmem:[%s307 + $0xd4] sm:$0xf]
      %v398 = vld [vmem:[%s307 + $0xd8] sm:$0xf]
      %v399 = vld [vmem:[%s307 + $0xdc] sm:$0xf]
      %v400 = vld [vmem:[%s307 + $0xe0] sm:$0xf]
      %v401 = vld [vmem:[%s307 + $0xe4] sm:$0xf]
      %v402 = vld [vmem:[%s307 + $0xe8] sm:$0xf]
      %v403 = vld [vmem:[%s307 + $0xec] sm:$0xf]
      %v404 = vld [vmem:[%s307 + $0xf0] sm:$0xf]
      %v405 = vld [vmem:[%s307 + $0xf4] sm:$0xf]
      %v406 = vld [vmem:[%s307 + $0xf8] sm:$0xf]
      %v407 = vld [vmem:[%s307 + $0xfc] sm:$0xf]
      %v408 = vld [vmem:[%s307 + $0x100] sm:$0xf]
      %v409 = vld [vmem:[%s307 + $0x104] sm:$0xf]
      %v410 = vld [vmem:[%s307 + $0x108] sm:$0xf]
      %v411 = vld [vmem:[%s307 + $0x10c] sm:$0xf]
      %v412 = vld [vmem:[%s307 + $0x110] sm:$0xf]
      %v413 = vld [vmem:[%s307 + $0x114] sm:$0xf]
      %v414 = vld [vmem:[%s307 + $0x118] sm:$0xf]
      %v415 = vld [vmem:[%s307 + $0x11c] sm:$0xf]
      %v416 = vld [vmem:[%s2] sm:$0xff]
      %v417 = vld [vmem:[%s2 + $0x8] sm:$0xff]
      %v418 = vld [vmem:[%s2 + $0x10] sm:$0xff]
      %v419 = vld [vmem:[%s2 + $0x18] sm:$0xff]
      %v420 = vld [vmem:[%s2 + $0x20] sm:$0xff]
      %v421 = vld [vmem:[%s2 + $0x28] sm:$0xff]
      %v440 = vunpack.c.l.b16 %v326
      %v441 = vunpack.c.h.b16 %v326
      %v442 = vunpack.c.l.b16 %v327
      %v443 = vunpack.c.h.b16 %v327
      %v444 = vunpack.c.l.b16 %v328
      %v445 = vunpack.c.l.b16 %v329
      %v446 = vunpack.c.h.b16 %v329
      %v447 = vunpack.c.l.b16 %v330
      %v448 = vunpack.c.h.b16 %v330
      %v449 = vunpack.c.l.b16 %v331
      %v450 = vunpack.c.l.b16 %v332
      %v451 = vunpack.c.h.b16 %v332
      %v452 = vunpack.c.l.b16 %v333
      %v453 = vunpack.c.h.b16 %v333
      %v454 = vunpack.c.l.b16 %v334
      %v455 = vunpack.c.l.b16 %v335
      %v456 = vunpack.c.h.b16 %v335
      %v457 = vunpack.c.l.b16 %v336
      %v458 = vunpack.c.h.b16 %v336
      %v459 = vunpack.c.l.b16 %v337
      %v460 = vunpack.c.l.b16 %v338
      %v461 = vunpack.c.h.b16 %v338
      %v462 = vunpack.c.l.b16 %v339
      %v463 = vunpack.c.h.b16 %v339
      %v464 = vunpack.c.l.b16 %v340
      %v465 = vunpack.c.l.b16 %v341
      %v466 = vunpack.c.h.b16 %v341
      %v467 = vunpack.c.l.b16 %v342
      %v468 = vunpack.c.h.b16 %v342
      %v469 = vunpack.c.l.b16 %v343
      %v470 = vpack.c.b16 %v445, %v440
      %v471 = vpack.c.b16 %v446, %v441
      %v472 = vpack.c.b16 %v447, %v442
      %v473 = vpack.c.b16 %v448, %v443
      %v474 = vpack.c.b16 %v449, %v444
      %v475 = vpack.c.b16 %v455, %v450
      %v476 = vpack.c.b16 %v456, %v451
      %v477 = vpack.c.b16 %v457, %v452
      %v478 = vpack.c.b16 %v458, %v453
      %v479 = vpack.c.b16 %v459, %v454
      %v480 = vpack.c.b16 %v465, %v460
      %v481 = vpack.c.b16 %v466, %v461
      %v482 = vpack.c.b16 %v467, %v462
      %v483 = vpack.c.b16 %v468, %v463
      %v484 = vpack.c.b16 %v469, %v464
      %v569 = vunpack.c.l.b16 %v344
      %v570 = vunpack.c.l.b16 %v345
      %v571 = vunpack.c.l.b16 %v346
      %v572 = vunpack.c.l.b16 %v347
      %v573 = vunpack.c.l.b16 %v348
      %v574 = vunpack.c.l.b16 %v349
      %v575 = vunpack.c.l.b16 %v350
      %v576 = vunpack.c.l.b16 %v351
      %v577 = vunpack.c.l.b16 %v352
      %v578 = vunpack.c.l.b16 %v353
      %v579 = vunpack.c.l.b16 %v354
      %v580 = vunpack.c.l.b16 %v355
      %v581 = vunpack.c.l.b16 %v356
      %v582 = vunpack.c.l.b16 %v357
      %v583 = vunpack.c.l.b16 %v358
      %v584 = vunpack.c.l.b16 %v359
      %v585 = vunpack.c.l.b16 %v360
      %v586 = vunpack.c.l.b16 %v361
      %v587 = vunpack.c.l.b16 %v362
      %v588 = vunpack.c.l.b16 %v363
      %v589 = vunpack.c.l.b16 %v364
      %v590 = vunpack.c.l.b16 %v365
      %v591 = vunpack.c.l.b16 %v366
      %v592 = vunpack.c.l.b16 %v367
      %v593 = vunpack.c.l.b16 %v368
      %v594 = vunpack.c.l.b16 %v369
      %v595 = vunpack.c.l.b16 %v370
      %v596 = vunpack.c.l.b16 %v371
      %v597 = vunpack.c.l.b16 %v372
      %v598 = vunpack.c.l.b16 %v373
      %v599 = vunpack.c.l.b16 %v374
      %v600 = vunpack.c.l.b16 %v375
      %v601 = vunpack.c.l.b16 %v376
      %v602 = vunpack.c.l.b16 %v377
      %v603 = vunpack.c.l.b16 %v378
      %v604 = vunpack.c.l.b16 %v379
      %v605 = vunpack.c.l.b16 %v380
      %v606 = vunpack.c.l.b16 %v381
      %v607 = vunpack.c.l.b16 %v382
      %v608 = vunpack.c.l.b16 %v383
      %v609 = vunpack.c.l.b16 %v384
      %v610 = vunpack.c.l.b16 %v385
      %v611 = vunpack.c.l.b16 %v386
      %v612 = vunpack.c.l.b16 %v387
      %v613 = vunpack.c.l.b16 %v388
      %v614 = vunpack.c.l.b16 %v389
      %v615 = vunpack.c.l.b16 %v390
      %v616 = vunpack.c.l.b16 %v391
      %v617 = vunpack.c.l.b16 %v392
      %v618 = vunpack.c.l.b16 %v393
      %v619 = vunpack.c.l.b16 %v394
      %v620 = vunpack.c.l.b16 %v395
      %v621 = vunpack.c.l.b16 %v396
      %v622 = vunpack.c.l.b16 %v397
      %v623 = vunpack.c.l.b16 %v398
      %v624 = vunpack.c.l.b16 %v399
      %v625 = vunpack.c.l.b16 %v400
      %v626 = vunpack.c.l.b16 %v401
      %v627 = vunpack.c.l.b16 %v402
      %v628 = vunpack.c.l.b16 %v403
      %v629 = vunpack.c.l.b16 %v404
      %v630 = vunpack.c.l.b16 %v405
      %v631 = vunpack.c.l.b16 %v406
      %v632 = vunpack.c.l.b16 %v407
      %v633 = vunpack.c.l.b16 %v408
      %v634 = vunpack.c.l.b16 %v409
      %v635 = vunpack.c.l.b16 %v410
      %v636 = vunpack.c.l.b16 %v411
      %v637 = vunpack.c.l.b16 %v412
      %v638 = vunpack.c.l.b16 %v413
      %v639 = vunpack.c.l.b16 %v414
      %v640 = vunpack.c.l.b16 %v415
      %v641 = vpack.c.b16 %v570, %v569
      %v642 = vpack.c.b16 %v572, %v571
      %v643 = vpack.c.b16 %v574, %v573
      %v644 = vpack.c.b16 %v576, %v575
      %v645 = vpack.c.b16 %v578, %v577
      %v646 = vpack.c.b16 %v580, %v579
      %v647 = vpack.c.b16 %v582, %v581
      %v648 = vpack.c.b16 %v584, %v583
      %v649 = vpack.c.b16 %v586, %v585
      %v650 = vpack.c.b16 %v588, %v587
      %v651 = vpack.c.b16 %v590, %v589
      %v652 = vpack.c.b16 %v592, %v591
      %v653 = vpack.c.b16 %v594, %v593
      %v654 = vpack.c.b16 %v596, %v595
      %v655 = vpack.c.b16 %v598, %v597
      %v656 = vpack.c.b16 %v600, %v599
      %v657 = vpack.c.b16 %v602, %v601
      %v658 = vpack.c.b16 %v604, %v603
      %v659 = vpack.c.b16 %v606, %v605
      %v660 = vpack.c.b16 %v608, %v607
      %v661 = vpack.c.b16 %v610, %v609
      %v662 = vpack.c.b16 %v612, %v611
      %v663 = vpack.c.b16 %v614, %v613
      %v664 = vpack.c.b16 %v616, %v615
      %v665 = vpack.c.b16 %v618, %v617
      %v666 = vpack.c.b16 %v620, %v619
      %v667 = vpack.c.b16 %v622, %v621
      %v668 = vpack.c.b16 %v624, %v623
      %v669 = vpack.c.b16 %v626, %v625
      %v670 = vpack.c.b16 %v628, %v627
      %v671 = vpack.c.b16 %v630, %v629
      %v672 = vpack.c.b16 %v632, %v631
      %v673 = vpack.c.b16 %v634, %v633
      %v674 = vpack.c.b16 %v636, %v635
      %v675 = vpack.c.b16 %v638, %v637
      %v676 = vpack.c.b16 %v640, %v639
      %vm713 = vcmask 523264
      %v715 = vsel %vm713, %v474, 0
      %v718 = vsel %vm713, %v479, 0
      %v721 = vsel %vm713, %v484, 0
      %723 = vmatprep.subr.bf16.mxu0 0
      %724 = vmatpush1.bf16.msra.mxu0 %v641
      %725 = vmatprep.subr.bf16.mxu0 0
      %726 = vmatpush1.bf16.msra.mxu0 %v642
      %727 = vmatprep.subr.bf16.mxu0 0
      %728 = vmatpush1.bf16.msra.mxu0 %v643
      %729 = vmatprep.subr.bf16.mxu0 0
      %730 = vmatpush1.bf16.msra.mxu0 %v644
      %731 = vmatprep.subr.bf16.mxu0 0
      %732 = vmatpush1.bf16.msra.mxu0 %v645
      %733 = vmatprep.subr.bf16.mxu0 0
      %734 = vmatpush1.bf16.msra.mxu0 %v646
      %735 = vmatprep.subr.bf16.mxu0 0
      %736 = vmatpush1.bf16.msra.mxu0 %v647
      %737 = vmatprep.subr.bf16.mxu0 0
      %738 = vmatpush1.bf16.msra.mxu0 %v648
      %739 = vmatprep.subr.bf16.mxu0 0
      %740 = vmatpush1.bf16.msra.mxu0 %v649
      %741 = vmatprep.subr.bf16.mxu0 0
      %742 = vmatpush1.bf16.msra.mxu0 %v650
      %743 = vmatprep.subr.bf16.mxu0 0
      %744 = vmatpush1.bf16.msra.mxu0 %v651
      %745 = vmatprep.subr.bf16.mxu0 0
      %746 = vmatpush1.bf16.msra.mxu0 %v652
      %747 = vmatprep.subr.bf16.mxu0 0
      %748 = vmatpush1.bf16.msra.mxu0 %v653
      %749 = vmatprep.subr.bf16.mxu0 0
      %750 = vmatpush1.bf16.msra.mxu0 %v654
      %751 = vmatprep.subr.bf16.mxu0 0
      %752 = vmatpush1.bf16.msra.mxu0 %v655
      %753 = vmatprep.subr.bf16.mxu0 0
      %754 = vmatpush1.bf16.msra.mxu0 %v656
      %755 = vmatprep.mubr.bf16.mxu0 %v471
      %756 = vmatmul.mubr.bf16.gmra.mrb[0].mxu0 %v470
      %v757 = vpop.f32.mrb[0].mxu0
      %v758 = vadd.f32 %v416, %v757
      %v759 = vpop.f32.mrb[0].mxu0
      %v760 = vpop.f32.mrb[0].mxu0
      %v761 = vadd.f32 %v417, %v760
      %v762 = vpop.f32.mrb[0].mxu0
      %763 = vmatprep.mubr.bf16.mxu0 %v476
      %764 = vmatmul.mubr.bf16.gmra.mrb[0].mxu0 %v475
      %v765 = vpop.f32.mrb[0].mxu0
      %v766 = vadd.f32 %v418, %v765
      %v767 = vpop.f32.mrb[0].mxu0
      %v768 = vpop.f32.mrb[0].mxu0
      %v769 = vadd.f32 %v419, %v768
      %v770 = vpop.f32.mrb[0].mxu0
      %771 = vmatprep.mubr.bf16.mxu0 %v481
      %772 = vmatmul.mubr.bf16.gmra.mrb[0].mxu0 %v480
      %v773 = vpop.f32.mrb[0].mxu0
      %v774 = vadd.f32 %v420, %v773
      %v775 = vpop.f32.mrb[0].mxu0
      %v776 = vpop.f32.mrb[0].mxu0
      %v777 = vadd.f32 %v421, %v776
      %v778 = vpop.f32.mrb[0].mxu0
      %779 = vdwg.mxu0
      %780 = vmatprep.subr.bf16.mxu0 0
      %781 = vmatpush1.bf16.msra.mxu0 %v657
      %782 = vmatprep.subr.bf16.mxu0 0
      %783 = vmatpush1.bf16.msra.mxu0 %v658
      %784 = vmatprep.subr.bf16.mxu0 0
      %785 = vmatpush1.bf16.msra.mxu0 %v659
      %786 = vmatprep.subr.bf16.mxu0 0
      %787 = vmatpush1.bf16.msra.mxu0 %v660
      %788 = vmatprep.subr.bf16.mxu0 0
      %789 = vmatpush1.bf16.msra.mxu0 %v661
      %790 = vmatprep.subr.bf16.mxu0 0
      %791 = vmatpush1.bf16.msra.mxu0 %v662
      %792 = vmatprep.subr.bf16.mxu0 0
      %793 = vmatpush1.bf16.msra.mxu0 %v663
      %794 = vmatprep.subr.bf16.mxu0 0
      %795 = vmatpush1.bf16.msra.mxu0 %v664
      %796 = vmatprep.subr.bf16.mxu0 0
      %797 = vmatpush1.bf16.msra.mxu0 %v665
      %798 = vmatprep.subr.bf16.mxu0 0
      %799 = vmatpush1.bf16.msra.mxu0 %v666
      %800 = vmatprep.subr.bf16.mxu0 0
      %801 = vmatpush1.bf16.msra.mxu0 %v667
      %802 = vmatprep.subr.bf16.mxu0 0
      %803 = vmatpush1.bf16.msra.mxu0 %v668
      %804 = vmatprep.subr.bf16.mxu0 0
      %805 = vmatpush1.bf16.msra.mxu0 %v669
      %806 = vmatprep.subr.bf16.mxu0 0
      %807 = vmatpush1.bf16.msra.mxu0 %v670
      %808 = vmatprep.subr.bf16.mxu0 0
      %809 = vmatpush1.bf16.msra.mxu0 %v671
      %810 = vmatprep.subr.bf16.mxu0 0
      %811 = vmatpush1.bf16.msra.mxu0 %v672
      %812 = vmatprep.mubr.bf16.mxu0 %v473
      %813 = vmatmul.mubr.bf16.gmra.mrb[0].mxu0 %v472
      %v814 = vpop.f32.mrb[0].mxu0
      %v815 = vadd.f32 %v758, %v814
      %v816 = vpop.f32.mrb[0].mxu0
      %v817 = vpop.f32.mrb[0].mxu0
      %v818 = vadd.f32 %v761, %v817
      %v819 = vpop.f32.mrb[0].mxu0
      %820 = vmatprep.mubr.bf16.mxu0 %v478
      %821 = vmatmul.mubr.bf16.gmra.mrb[0].mxu0 %v477
      %v822 = vpop.f32.mrb[0].mxu0
      %v823 = vadd.f32 %v766, %v822
      %v824 = vpop.f32.mrb[0].mxu0
      %v825 = vpop.f32.mrb[0].mxu0
      %v826 = vadd.f32 %v769, %v825
      %v827 = vpop.f32.mrb[0].mxu0
      %828 = vmatprep.mubr.bf16.mxu0 %v483
      %829 = vmatmul.mubr.bf16.gmra.mrb[0].mxu0 %v482
      %v830 = vpop.f32.mrb[0].mxu0
      %v831 = vadd.f32 %v774, %v830
      %v832 = vpop.f32.mrb[0].mxu0
      %v833 = vpop.f32.mrb[0].mxu0
      %v834 = vadd.f32 %v777, %v833
      %v835 = vpop.f32.mrb[0].mxu0
      %836 = vdwg.mxu0
      %837 = vmatprep.subr.bf16.mxu0 0
      %838 = vmatpush1.bf16.msra.mxu0 %v673
      %839 = vmatprep.subr.bf16.mxu0 0
      %840 = vmatpush1.bf16.msra.mxu0 %v674
      %841 = vmatprep.subr.bf16.mxu0 0
      %842 = vmatpush1.bf16.msra.mxu0 %v675
      %843 = vmatprep.subr.bf16.mxu0 0
      %844 = vmatpush1.bf16.msra.mxu0 %v676
      %845 = vmatprep.subr.bf16.mxu0 0
      %846 = vmatpush1.bf16.msra.mxu0 0
      %847 = vmatprep.subr.bf16.mxu0 0
      %848 = vmatpush1.bf16.msra.mxu0 0
      %849 = vmatprep.subr.bf16.mxu0 0
      %850 = vmatpush1.bf16.msra.mxu0 0
      %851 = vmatprep.subr.bf16.mxu0 0
      %852 = vmatpush1.bf16.msra.mxu0 0
      %853 = vmatprep.subr.bf16.mxu0 0
      %854 = vmatpush1.bf16.msra.mxu0 0
      %855 = vmatprep.subr.bf16.mxu0 0
      %856 = vmatpush1.bf16.msra.mxu0 0
      %857 = vmatprep.subr.bf16.mxu0 0
      %858 = vmatpush1.bf16.msra.mxu0 0
      %859 = vmatprep.subr.bf16.mxu0 0
      %860 = vmatpush1.bf16.msra.mxu0 0
      %861 = vmatprep.subr.bf16.mxu0 0
      %862 = vmatpush1.bf16.msra.mxu0 0
      %863 = vmatprep.subr.bf16.mxu0 0
      %864 = vmatpush1.bf16.msra.mxu0 0
      %865 = vmatprep.subr.bf16.mxu0 0
      %866 = vmatpush1.bf16.msra.mxu0 0
      %867 = vmatprep.subr.bf16.mxu0 0
      %868 = vmatpush1.bf16.msra.mxu0 0
      %869 = vmatprep.mubr.bf16.mxu0 0
      %870 = vmatmul.mubr.bf16.gmra.mrb[0].mxu0 %v715
      %v871 = vpop.f32.mrb[0].mxu0
      %v872 = vadd.f32 %v815, %v871
      %v873 = vpop.f32.mrb[0].mxu0
      %v874 = vpop.f32.mrb[0].mxu0
      %v875 = vadd.f32 %v818, %v874
      %v876 = vpop.f32.mrb[0].mxu0
      %877 = vmatprep.mubr.bf16.mxu0 0
      %878 = vmatmul.mubr.bf16.gmra.mrb[0].mxu0 %v718
      %v879 = vpop.f32.mrb[0].mxu0
      %v880 = vadd.f32 %v823, %v879
      %v881 = vpop.f32.mrb[0].mxu0
      %v882 = vpop.f32.mrb[0].mxu0
      %v883 = vadd.f32 %v826, %v882
      %v884 = vpop.f32.mrb[0].mxu0
      %885 = vmatprep.mubr.bf16.mxu0 0
      %886 = vmatmul.mubr.bf16.gmra.mrb[0].mxu0 %v721
      %v887 = vpop.f32.mrb[0].mxu0
      %v888 = vadd.f32 %v831, %v887
      %v889 = vpop.f32.mrb[0].mxu0
      %v890 = vpop.f32.mrb[0].mxu0
      %v891 = vadd.f32 %v834, %v890
      %v892 = vpop.f32.mrb[0].mxu0
      %893 = vdwg.mxu0
      %v894 = vmax.f32 %v872, %v875
      %v895 = vsub.f32 %v872, %v894
      %v896 = vmul.f32 %v895, 1.442695
      %v897 = vpow.pop %v896
      %v898 = vsub.f32 %v875, %v894
      %v899 = vmul.f32 %v898, 1.442695
      %v900 = vpow.pop %v899
      %v901 = vadd.f32 %v897, %v900
      %v902 = vlog2.pop %v901
      %v903 = vmul.f32 %v902, 0.6931472
      %v904 = vadd.f32 %v894, %v903
      %v905 = vsub.f32 %v872, %v904
      %v906 = vsub.f32 %v875, %v904
      %v907 = vld [vmem:[%s311] sm:$0xff]
      %vm908 = vcmp.eq.s32.totalorder %v907, 1
      %v909 = vsel %vm908, 1, 0
      %v910 = vcvt.s32.f32 %v909
      %vm911 = vcmp.eq.s32.totalorder %v907, 0
      %v912 = vsel %vm911, 1, 0
      %v913 = vcvt.s32.f32 %v912
      %v914 = vsub.f32 0.0, %v906
      %v915 = vmul.f32 %v914, %v910
      %916 = vadd.xlane.f32.xlu0 %v915
      %v917 = vpop.xlane.xlu0 %916
      %v918 = vrot.slane %v917, 4
      %v919 = vadd.f32 %v917, %v918
      %v920 = vrot.slane %v919, 2
      %v921 = vadd.f32 %v919, %v920
      %v922 = vrot.slane %v921, 1
      %v923 = vadd.f32 %v921, %v922
      %s924 = vtos %v923
      %v925 = vsub.f32 0.0, %v905
      %v926 = vmul.f32 %v925, %v913
      %927 = vadd.xlane.f32.xlu0 %v926
      %v928 = vpop.xlane.xlu0 %927
      %v929 = vrot.slane %v928, 4
      %v930 = vadd.f32 %v928, %v929
      %v931 = vrot.slane %v930, 2
      %v932 = vadd.f32 %v930, %v931
      %v933 = vrot.slane %v932, 1
      %v934 = vadd.f32 %v932, %v933
      %s935 = vtos %v934
      %936 = vadd.xlane.f32.xlu0 %v910
      %v937 = vpop.xlane.xlu0 %936
      %v938 = vrot.slane %v937, 4
      %v939 = vadd.f32 %v937, %v938
      %v940 = vrot.slane %v939, 2
      %v941 = vadd.f32 %v939, %v940
      %v942 = vrot.slane %v941, 1
      %v943 = vadd.f32 %v941, %v942
      %s944 = vtos %v943
      %945 = vadd.xlane.f32.xlu0 %v913
      %v946 = vpop.xlane.xlu0 %945
      %v947 = vrot.slane %v946, 4
      %v948 = vadd.f32 %v946, %v947
      %v949 = vrot.slane %v948, 2
      %v950 = vadd.f32 %v948, %v949
      %v951 = vrot.slane %v950, 1
      %v952 = vadd.f32 %v950, %v951
      %s953 = vtos %v952
      %v954 = vld [vmem:[%s316] sm:$0xff]
      %v955 = vld [vmem:[%s316 + $0x8] sm:$0xff]
      %v956 = vld [vmem:[%s316 + $0x10] sm:$0xff]
      %v957 = vld [vmem:[%s316 + $0x18] sm:$0xff]
      %v958 = vsub.f32 %v880, %v954
      %v959 = vsub.f32 %v883, %v955
      %v960 = vsub.f32 %v888, %v956
      %v961 = vsub.f32 %v891, %v957
      %v962 = vand.u32 2147483647, %v958
      %v963 = vand.u32 2147483647, %v959
      %v964 = vand.u32 2147483647, %v960
      %v965 = vand.u32 2147483647, %v961
      %v966 = vld [vmem:[%s321] sm:$0xff]
      %v967 = vld [vmem:[%s321 + $0x8] sm:$0xff]
      %v968 = vld [vmem:[%s321 + $0x10] sm:$0xff]
      %v969 = vld [vmem:[%s321 + $0x18] sm:$0xff]
      %v970 = vmul.f32 %v962, %v966
      %v971 = vmul.f32 %v963, %v967
      %v972 = vmul.f32 %v964, %v968
      %v973 = vmul.f32 %v965, %v969
      %v974 = vadd.f32 %v970, %v971
      %v975 = vadd.f32 %v974, %v972
      %v976 = vadd.f32 %v975, %v973
      %977 = vadd.xlane.f32.xlu0 %v976
      %v978 = vpop.xlane.xlu0 %977
      %v979 = vrot.slane %v978, 4
      %v980 = vadd.f32 %v978, %v979
      %v981 = vrot.slane %v980, 2
      %v982 = vadd.f32 %v980, %v981
      %v983 = vrot.slane %v982, 1
      %v984 = vadd.f32 %v982, %v983
      %s985 = vtos %v984
      %v986 = vlaneseq
      %v987 = vand.u32 %v986, 127
      %vm988 = vcmp.eq.s32.totalorder %v987, 0
      %vm989 = vcmp.eq.s32.totalorder %v987, 1
      %vm990 = vcmp.eq.s32.totalorder %v987, 2
      %vm991 = vcmp.eq.s32.totalorder %v987, 3
      %vm992 = vcmp.eq.s32.totalorder %v987, 4
      %v993 = vstv %s985
      %v994 = vsel %vm992, %v993, 0.0
      %v995 = vstv %s953
      %v996 = vsel %vm991, %v995, %v994
      %v997 = vstv %s944
      %v998 = vsel %vm990, %v997, %v996
      %v999 = vstv %s935
      %v1000 = vsel %vm989, %v999, %v998
      %v1001 = vstv %s924
      %v1002 = vsel %vm988, %v1001, %v1000
      %1003 = vst [vmem:[%s324] sm:$0x1] %v1002
      %p1004 = scmp.lt.s32.totalorder %s17, 1
      %s1005 = scalar_select %p1004, %s17, 1
      %s1006 = scalar_lea.vmem %s6, %s1005
      // Predicated region
      $region45: #{siamrpn_forward.3} parent=43 // pred_check
        %p1007 = pneg %p186
      $region46: #{siamrpn_forward.3} parent=43 // pred_check_branch
        %1009 = sbr.rel (%p1007) target = $region48
      $region47: #{siamrpn_forward.3} parent=43 // pred_region
        _
      $region48: #{siamrpn_forward.3} parent=43 // pred_fallthru
        _
    $region44: #{siamrpn_forward.3} parent=5 // pred_fallthru
      _
    %p1010 = scmp.le.s32.totalorder 2, %s12
    // Predicated region
    $region49: #{siamrpn_forward.3} parent=5 // pred_check
      %p1011 = pneg %p1010
    $region50: #{siamrpn_forward.3} parent=5 // pred_check_branch
      %1013 = sbr.rel (%p1011) target = $region52
    $region51: #{siamrpn_forward.3} parent=5 // pred_region
      %s1014 = ssub.s32 %s12, 2
      // Predicated region
      $region53: #{siamrpn_forward.3} parent=51 // pred_check
        %p1015 = pneg %p192
      $region54: #{siamrpn_forward.3} parent=51 // pred_check_branch
        %1017 = sbr.rel (%p1015) target = $region56
      $region55: #{siamrpn_forward.3} parent=51 // pred_region
        %p1018 = scmp.lt.s32.totalorder %s18, 1
        %s1019 = scalar_select %p1018, %s18, 1
        %s1020 = scalar_lea.vmem %s6, %s1019
      $region56: #{siamrpn_forward.3} parent=51 // pred_fallthru
        _
    $region52: #{siamrpn_forward.3} parent=5 // pred_fallthru
      _
  $region6: #{siamrpn_forward.3} parent=0 // loop_footer
    %s16 = sadd.s32 1, %s12
  $region7: #{siamrpn_forward.3} parent=0 // loop_footer_branch
    %11 = sbr.rel target = $region3
  $region8: #{siamrpn_forward.3} parent=0 // loop_exit
    _

</llo_original>
